<compile_context>
chip_gen: v5e
topology: v5e:2x2
jax: 0.10.0
libtpu: 0.0.40
codegen_flags: <defaults>
</compile_context>

<pallas_src>
import jax
import jax.numpy as jnp
from jax import lax
from jax.experimental import pallas as pl
from jax.experimental.pallas import tpu as pltpu

# ----------------------------- config ---------------------------------------
B, N, E, H = 2, 8, 12, 32      # batch, nodes, edges, graph_hidden_size
GRAPH_HOPS = 2                 # config['graph_hops']
LANES = 128

# packed-weight row offsets (all multiples of 8 -> sublane-aligned slices)
R_FCZ_W = 0                    # (4H, H)  fc_z weight (acts on [fw|bw|fw*bw|fw-bw])
R_FCZ_B = R_FCZ_W + 4 * H      # (1, H)   fc_z bias (padded to 8 rows)
R_WZR_H = R_FCZ_B + 8          # (H, 2H)  [Wz_h | Wr_h]
R_WZRT_A = R_WZR_H + H         # (H, 3H)  [Wz_a | Wr_a | Wt_a]
R_WT_H = R_WZRT_A + H          # (H, H)   Wt_h
R_WMAX = R_WT_H + H            # (H, H)   linear_max
R_TOTAL = R_WMAX + H           # 264 rows

_TN = (((0,), (0,)), ((), ()))   # contract dim0(lhs) with dim0(rhs) => lhs.T @ rhs


# ----------------------------- kernel ---------------------------------------
def graphnn_kernel(ns_ref, n2e_ref, e2n_ref, w_ref,
                   nodes_ref, gemb_ref,
                   n2e_bd_ref, e2n_bd_ref, cat4_ref):
    f32 = jnp.float32
    h = ns_ref[...]                                        # (2N, H), batch-blocked rows

    # --- weights: one packed DMA, static sublane-aligned slices ---------------
    fcz_w = w_ref[R_FCZ_W:R_FCZ_W + 4 * H, 0:H]            # (4H, H)
    fcz_b = w_ref[R_FCZ_B:R_FCZ_B + 1, 0:H]                # (1, H)
    wzr_h = w_ref[R_WZR_H:R_WZR_H + H, 0:2 * H]            # (H, 2H)
    wzrt_a = w_ref[R_WZRT_A:R_WZRT_A + H, 0:3 * H]         # (H, 3H)
    wt_h = w_ref[R_WT_H:R_WT_H + H, 0:H]                   # (H, H)
    wmax = w_ref[R_WMAX:R_WMAX + H, 0:H]                   # (H, H)

    # --- block-diagonal incidence matrices, built once with masked stores -----
    n2e_bd_ref[...] = jnp.zeros((B * E, B * N), f32)
    n2e_bd_ref[0:E, 0:N] = n2e_ref[0]
    n2e_bd_ref[E:2 * E, N:2 * N] = n2e_ref[1]
    e2n_bd_ref[...] = jnp.zeros((B * N, B * E), f32)
    e2n_bd_ref[0:N, 0:E] = e2n_ref[0]
    e2n_bd_ref[N:2 * N, E:2 * E] = e2n_ref[1]
    n2e_bd = n2e_bd_ref[...]                               # (2E, 2N)
    e2n_bd = e2n_bd_ref[...]                               # (2N, 2E)

    # --- loop-invariant normalisation (exact 1/(sum+1), hoisted) --------------
    inv_norm_bw = 1.0 / (jnp.sum(e2n_bd, axis=1, keepdims=True) + 1.0)      # (2N, 1)
    # column sums of node2edge (== row sums of node2edge.T) without
    # materialising the transpose: n2e_bd.T @ ones, broadcast across all lanes.
    colsum_n2e = lax.dot_general(n2e_bd, jnp.ones((B * E, H), f32), _TN,
                                 preferred_element_type=f32)                # (2N, H)
    inv_norm_fw = 1.0 / (colsum_n2e + 1.0)                                  # (2N, H)

    for _ in range(GRAPH_HOPS):
        # backward message passing: mp(h, node2edge, edge2node)
        emb_bw = jnp.dot(n2e_bd, h, preferred_element_type=f32)             # (2E, H)
        bw = (jnp.dot(e2n_bd, emb_bw, preferred_element_type=f32)
              + h) * inv_norm_bw                                            # (2N, H)
        # forward message passing: mp(h, edge2node.T, node2edge.T) --
        # transposed operands consumed via TN dot_general, never materialised.
        emb_fw = lax.dot_general(e2n_bd, h, _TN,
                                 preferred_element_type=f32)                # (2E, H)
        fw = (lax.dot_general(n2e_bd, emb_fw, _TN,
                              preferred_element_type=f32)
              + h) * inv_norm_fw                                            # (2N, H)

        # GatedFusion(fw, bw): one K=4H matmul on the lane-concatenated feats
        cat4_ref[:, 0:H] = fw
        cat4_ref[:, H:2 * H] = bw
        cat4_ref[:, 2 * H:3 * H] = fw * bw
        cat4_ref[:, 3 * H:4 * H] = fw - bw
        zf = jax.nn.sigmoid(
            jnp.dot(cat4_ref[...], fcz_w, preferred_element_type=f32) + fcz_b)
        agg = (1.0 - zf) * fw + zf * bw                                     # (2N, H)

        # GRUStep(h, agg): lane-fused weights -> 3 matmuls per hop
        zr_h = jnp.dot(h, wzr_h, preferred_element_type=f32)                # (2N, 2H)
        zrt_a = jnp.dot(agg, wzrt_a, preferred_element_type=f32)            # (2N, 3H)
        z = jax.nn.sigmoid(zr_h[:, 0:H] + zrt_a[:, 0:H])
        r = jax.nn.sigmoid(zr_h[:, H:2 * H] + zrt_a[:, H:2 * H])
        t = jnp.tanh(jnp.dot(r * h, wt_h, preferred_element_type=f32)
                     + zrt_a[:, 2 * H:3 * H])
        h = (1.0 - z) * h + z * t                                           # (2N, H)

    # --- outputs ---------------------------------------------------------------
    # Node states emitted directly in (node-major, batch-minor) row order so the
    # wrapper only reshapes (no data-moving transpose launch).
    for b in range(B):
        for n in range(N):
            nodes_ref[n * B + b:n * B + b + 1, :] = h[b * N + n:b * N + n + 1, :]

    # graph_maxpool: max over nodes of linear_max(node_state), per batch
    pooled = jnp.dot(h, wmax, preferred_element_type=f32)                   # (2N, H)
    gemb_ref[0:1, :] = jnp.max(pooled[0:N, :], axis=0, keepdims=True)
    gemb_ref[1:2, :] = jnp.max(pooled[N:2 * N, :], axis=0, keepdims=True)


# ----------------------------- wrapper ---------------------------------------
def _pack_weights(params):
    """Pack all module weights into one (R_TOTAL, 128) f32 slab (single DMA)."""
    fcz_w, fcz_b, wz, wr, wt, wmax = params

    def lanes(x):
        return jnp.pad(x, ((0, 0), (0, LANES - x.shape[1])))

    blocks = [
        lanes(fcz_w),                                                # rows 0:128
        lanes(jnp.pad(fcz_b, ((0, 7), (0, 0)))),                     # rows 128:136
        lanes(jnp.concatenate([wz[:H], wr[:H]], axis=1)),            # rows 136:168
        lanes(jnp.concatenate([wz[H:], wr[H:], wt[H:]], axis=1)),    # rows 168:200
        lanes(wt[:H]),                                               # rows 200:232
        lanes(wmax),                                                 # rows 232:264
    ]
    packed = jnp.concatenate(blocks, axis=0)
    assert packed.shape == (R_TOTAL, LANES)
    return packed


@jax.jit
def graphnn_forward(node_state, node2edge, edge2node, params):
    w_pack = _pack_weights(params)

    nodes, gemb = pl.pallas_call(
        graphnn_kernel,
        out_shape=(jax.ShapeDtypeStruct((B * N, H), jnp.float32),   # node rows (n-major, b-minor)
                   jax.ShapeDtypeStruct((B, H), jnp.float32)),      # graph embedding per batch
        in_specs=[pl.BlockSpec(memory_space=pltpu.MemorySpace.VMEM)] * 4,
        out_specs=(pl.BlockSpec(memory_space=pltpu.MemorySpace.VMEM),
                   pl.BlockSpec(memory_space=pltpu.MemorySpace.VMEM)),
        scratch_shapes=[
            pltpu.VMEM((B * E, B * N), jnp.float32),   # block-diag node2edge
            pltpu.VMEM((B * N, B * E), jnp.float32),   # block-diag edge2node
            pltpu.VMEM((B * N, 4 * H), jnp.float32),   # gated-fusion features
        ],
    )(node_state.reshape(B * N, H), node2edge, edge2node, w_pack)

    # Rows are already node-major / batch-minor: contiguous reshape only.
    node_out = nodes.reshape(N, B, H)      # matches node_state.transpose(0, 1)
    gemb_out = gemb[None, :, :]            # matches graph_embedding.unsqueeze(0)
    return node_out, gemb_out


# --------------------------- pure-JAX reference -------------------------------
def graphnn_reference(node_state, node2edge, edge2node, params):
    fcz_w, fcz_b, wz, wr, wt, wmax = params
    h = node_state
    n2e_t = jnp.transpose(node2edge, (0, 2, 1))
    e2n_t = jnp.transpose(edge2node, (0, 2, 1))
    norm_bw = jnp.sum(edge2node, axis=2, keepdims=True) + 1.0
    norm_fw = jnp.sum(n2e_t, axis=2, keepdims=True) + 1.0
    for _ in range(GRAPH_HOPS):
        bw = (jnp.einsum('bne,beh->bnh', edge2node,
                         jnp.einsum('ben,bnh->beh', node2edge, h)) + h) / norm_bw
        fw = (jnp.einsum('bne,beh->bnh', n2e_t,
                         jnp.einsum('ben,bnh->beh', e2n_t, h)) + h) / norm_fw
        cat4 = jnp.concatenate([fw, bw, fw * bw, fw - bw], axis=-1)
        zf = jax.nn.sigmoid(cat4 @ fcz_w + fcz_b)
        agg = (1.0 - zf) * fw + zf * bw
        ha = jnp.concatenate([h, agg], axis=-1)
        z = jax.nn.sigmoid(ha @ wz)
        r = jax.nn.sigmoid(ha @ wr)
        t = jnp.tanh(jnp.concatenate([r * h, agg], axis=-1) @ wt)
        h = (1.0 - z) * h + z * t
    gemb = jnp.max(h @ wmax, axis=1)
    return jnp.transpose(h, (1, 0, 2)), gemb[None, :, :]


# ----------------------------- main ------------------------------------------
if __name__ == "__main__":
    key = jax.random.PRNGKey(0)
    keys = jax.random.split(key, 9)

    node_state = jax.random.normal(keys[0], (B, N, H), dtype=jnp.float32)
    node2edge = (jax.random.uniform(keys[1], (B, E, N)) < 0.3).astype(jnp.float32)
    edge2node = (jax.random.uniform(keys[2], (B, N, E)) < 0.3).astype(jnp.float32)

    # Deterministic parameter init (weights stored transposed: (in, out)).
    scale = 0.1
    fcz_w = scale * jax.random.normal(keys[3], (4 * H, H), dtype=jnp.float32)
    fcz_b = scale * jax.random.normal(keys[4], (1, H), dtype=jnp.float32)
    wz = scale * jax.random.normal(keys[5], (2 * H, H), dtype=jnp.float32)
    wr = scale * jax.random.normal(keys[6], (2 * H, H), dtype=jnp.float32)
    wt = scale * jax.random.normal(keys[7], (2 * H, H), dtype=jnp.float32)
    wmax = scale * jax.random.normal(keys[8], (H, H), dtype=jnp.float32)
    params = (fcz_w, fcz_b, wz, wr, wt, wmax)

    node_out, gemb = graphnn_forward(node_state, node2edge, edge2node, params)
    node_out = jax.block_until_ready(node_out)
    gemb = jax.block_until_ready(gemb)

    ref_node, ref_gemb = graphnn_reference(node_state, node2edge, edge2node, params)

    assert node_out.shape == (N, B, H) and gemb.shape == (1, B, H)
    assert jnp.allclose(node_out, ref_node, atol=1e-4, rtol=1e-4)
    assert jnp.allclose(gemb, ref_gemb, atol=1e-4, rtol=1e-4)

    print("KERNEL_OK")
</pallas_src>

<mosaic_0001>
module attributes {stable_mosaic.version = 11 : i64} {
  func.func @graphnn_kernel(%arg0: memref<16x32xf32, #tpu.memory_space<vmem>>, %arg1: memref<2x12x8xf32, #tpu.memory_space<vmem>>, %arg2: memref<2x8x12xf32, #tpu.memory_space<vmem>>, %arg3: memref<264x128xf32, #tpu.memory_space<vmem>>, %arg4: memref<16x32xf32, #tpu.memory_space<vmem>>, %arg5: memref<2x32xf32, #tpu.memory_space<vmem>>, %arg6: memref<24x16xf32, #tpu.memory_space<vmem>>, %arg7: memref<16x24xf32, #tpu.memory_space<vmem>>, %arg8: memref<16x128xf32, #tpu.memory_space<vmem>>) attributes {dimension_semantics = [], scalar_prefetch = 0 : i64, scratch_operands = 3 : i64, tpu.core_type = #tpu.core_type<tc>} {
    %c0 = arith.constant 0 : index
    %c0_0 = arith.constant 0 : index
    %0 = vector.load %arg0[%c0, %c0_0] : memref<16x32xf32, #tpu.memory_space<vmem>>, vector<16x32xf32>
    %c0_1 = arith.constant 0 : index
    %c0_2 = arith.constant 0 : index
    %1 = vector.load %arg3[%c0_1, %c0_2] : memref<264x128xf32, #tpu.memory_space<vmem>>, vector<128x32xf32>
    %c128 = arith.constant 128 : index
    %c0_3 = arith.constant 0 : index
    %2 = vector.load %arg3[%c128, %c0_3] : memref<264x128xf32, #tpu.memory_space<vmem>>, vector<1x32xf32>
    %c136 = arith.constant 136 : index
    %c0_4 = arith.constant 0 : index
    %3 = vector.load %arg3[%c136, %c0_4] : memref<264x128xf32, #tpu.memory_space<vmem>>, vector<32x64xf32>
    %c168 = arith.constant 168 : index
    %c0_5 = arith.constant 0 : index
    %4 = vector.load %arg3[%c168, %c0_5] : memref<264x128xf32, #tpu.memory_space<vmem>>, vector<32x96xf32>
    %c200 = arith.constant 200 : index
    %c0_6 = arith.constant 0 : index
    %5 = vector.load %arg3[%c200, %c0_6] : memref<264x128xf32, #tpu.memory_space<vmem>>, vector<32x32xf32>
    %c232 = arith.constant 232 : index
    %c0_7 = arith.constant 0 : index
    %6 = vector.load %arg3[%c232, %c0_7] : memref<264x128xf32, #tpu.memory_space<vmem>>, vector<32x32xf32>
    %cst = arith.constant 0.000000e+00 : f32
    %7 = vector.broadcast %cst : f32 to vector<24x16xf32>
    %c0_8 = arith.constant 0 : index
    %c0_9 = arith.constant 0 : index
    %8 = vector.load %arg6[%c0_8, %c0_9] : memref<24x16xf32, #tpu.memory_space<vmem>>, vector<24x16xf32>
    tpu.vector_store %arg6[%c0_8, %c0_9], %7 {strides = array<i32>} : memref<24x16xf32, #tpu.memory_space<vmem>>, vector<24x16xf32>,
    %c0_10 = arith.constant 0 : index
    %c0_11 = arith.constant 0 : index
    %c0_12 = arith.constant 0 : index
    %9 = vector.load %arg1[%c0_10, %c0_11, %c0_12] : memref<2x12x8xf32, #tpu.memory_space<vmem>>, vector<1x12x8xf32>
    %10 = vector.shape_cast %9 : vector<1x12x8xf32> to vector<12x8xf32>
    %c0_13 = arith.constant 0 : index
    %c0_14 = arith.constant 0 : index
    %11 = vector.load %arg6[%c0_13, %c0_14] : memref<24x16xf32, #tpu.memory_space<vmem>>, vector<12x8xf32>
    tpu.vector_store %arg6[%c0_13, %c0_14], %10 {strides = array<i32>} : memref<24x16xf32, #tpu.memory_space<vmem>>, vector<12x8xf32>,
    %c1 = arith.constant 1 : index
    %c0_15 = arith.constant 0 : index
    %c0_16 = arith.constant 0 : index
    %12 = vector.load %arg1[%c1, %c0_15, %c0_16] : memref<2x12x8xf32, #tpu.memory_space<vmem>>, vector<1x12x8xf32>
    %13 = vector.shape_cast %12 : vector<1x12x8xf32> to vector<12x8xf32>
    %c12 = arith.constant 12 : index
    %c8 = arith.constant 8 : index
    %14 = vector.load %arg6[%c12, %c8] : memref<24x16xf32, #tpu.memory_space<vmem>>, vector<12x8xf32>
    tpu.vector_store %arg6[%c12, %c8], %13 {strides = array<i32>} : memref<24x16xf32, #tpu.memory_space<vmem>>, vector<12x8xf32>,
    %cst_17 = arith.constant 0.000000e+00 : f32
    %15 = vector.broadcast %cst_17 : f32 to vector<16x24xf32>
    %c0_18 = arith.constant 0 : index
    %c0_19 = arith.constant 0 : index
    %16 = vector.load %arg7[%c0_18, %c0_19] : memref<16x24xf32, #tpu.memory_space<vmem>>, vector<16x24xf32>
    tpu.vector_store %arg7[%c0_18, %c0_19], %15 {strides = array<i32>} : memref<16x24xf32, #tpu.memory_space<vmem>>, vector<16x24xf32>,
    %c0_20 = arith.constant 0 : index
    %c0_21 = arith.constant 0 : index
    %c0_22 = arith.constant 0 : index
    %17 = vector.load %arg2[%c0_20, %c0_21, %c0_22] : memref<2x8x12xf32, #tpu.memory_space<vmem>>, vector<1x8x12xf32>
    %18 = vector.shape_cast %17 : vector<1x8x12xf32> to vector<8x12xf32>
    %c0_23 = arith.constant 0 : index
    %c0_24 = arith.constant 0 : index
    %19 = vector.load %arg7[%c0_23, %c0_24] : memref<16x24xf32, #tpu.memory_space<vmem>>, vector<8x12xf32>
    tpu.vector_store %arg7[%c0_23, %c0_24], %18 {strides = array<i32>} : memref<16x24xf32, #tpu.memory_space<vmem>>, vector<8x12xf32>,
    %c1_25 = arith.constant 1 : index
    %c0_26 = arith.constant 0 : index
    %c0_27 = arith.constant 0 : index
    %20 = vector.load %arg2[%c1_25, %c0_26, %c0_27] : memref<2x8x12xf32, #tpu.memory_space<vmem>>, vector<1x8x12xf32>
    %21 = vector.shape_cast %20 : vector<1x8x12xf32> to vector<8x12xf32>
    %c8_28 = arith.constant 8 : index
    %c12_29 = arith.constant 12 : index
    %22 = vector.load %arg7[%c8_28, %c12_29] : memref<16x24xf32, #tpu.memory_space<vmem>>, vector<8x12xf32>
    tpu.vector_store %arg7[%c8_28, %c12_29], %21 {strides = array<i32>} : memref<16x24xf32, #tpu.memory_space<vmem>>, vector<8x12xf32>,
    %c0_30 = arith.constant 0 : index
    %c0_31 = arith.constant 0 : index
    %23 = vector.load %arg6[%c0_30, %c0_31] : memref<24x16xf32, #tpu.memory_space<vmem>>, vector<24x16xf32>
    %c0_32 = arith.constant 0 : index
    %c0_33 = arith.constant 0 : index
    %24 = vector.load %arg7[%c0_32, %c0_33] : memref<16x24xf32, #tpu.memory_space<vmem>>, vector<16x24xf32>
    %cst_34 = arith.constant dense<0.000000e+00> : vector<16xf32>
    %25 = vector.multi_reduction <add>, %24, %cst_34 [1] : vector<16x24xf32> to vector<16xf32>
    %26 = vector.shape_cast %25 : vector<16xf32> to vector<16x1xf32>
    %cst_35 = arith.constant 1.000000e+00 : f32
    %27 = vector.broadcast %cst_35 : f32 to vector<16x1xf32>
    %28 = arith.addf %26, %27 : vector<16x1xf32>
    %cst_36 = arith.constant 1.000000e+00 : f32
    %29 = vector.broadcast %cst_36 : f32 to vector<16x1xf32>
    %30 = arith.divf %29, %28 : vector<16x1xf32>
    %cst_37 = arith.constant 1.000000e+00 : f32
    %31 = vector.broadcast %cst_37 : f32 to vector<24x32xf32>
    %cst_38 = arith.constant dense<0.000000e+00> : vector<16x32xf32>
    %32 = tpu.matmul %23, %31, %cst_38 {dimension_numbers = #tpu.dot_dimension_numbers<[0], [0], [1], [1], [0, 1, 1, 1], [], []>} : vector<24x16xf32>, vector<24x32xf32>, vector<16x32xf32> -> vector<16x32xf32>
    %cst_39 = arith.constant 1.000000e+00 : f32
    %33 = vector.broadcast %cst_39 : f32 to vector<16x32xf32>
    %34 = arith.addf %32, %33 : vector<16x32xf32>
    %cst_40 = arith.constant 1.000000e+00 : f32
    %35 = vector.broadcast %cst_40 : f32 to vector<16x32xf32>
    %36 = arith.divf %35, %34 : vector<16x32xf32>
    %cst_41 = arith.constant dense<0.000000e+00> : vector<24x32xf32>
    %37 = tpu.matmul %23, %0, %cst_41 {dimension_numbers = #tpu.dot_dimension_numbers<[1], [0], [0], [1], [0, 0, 1, 1], [], []>} : vector<24x16xf32>, vector<16x32xf32>, vector<24x32xf32> -> vector<24x32xf32>
    %cst_42 = arith.constant dense<0.000000e+00> : vector<16x32xf32>
    %38 = tpu.matmul %24, %37, %cst_42 {dimension_numbers = #tpu.dot_dimension_numbers<[1], [0], [0], [1], [0, 0, 1, 1], [], []>} : vector<16x24xf32>, vector<24x32xf32>, vector<16x32xf32> -> vector<16x32xf32>
    %39 = arith.addf %38, %0 : vector<16x32xf32>
    %40 = vector.broadcast %30 : vector<16x1xf32> to vector<16x32xf32>
    %41 = arith.mulf %39, %40 : vector<16x32xf32>
    %cst_43 = arith.constant dense<0.000000e+00> : vector<24x32xf32>
    %42 = tpu.matmul %24, %0, %cst_43 {dimension_numbers = #tpu.dot_dimension_numbers<[0], [0], [1], [1], [0, 1, 1, 1], [], []>} : vector<16x24xf32>, vector<16x32xf32>, vector<24x32xf32> -> vector<24x32xf32>
    %cst_44 = arith.constant dense<0.000000e+00> : vector<16x32xf32>
    %43 = tpu.matmul %23, %42, %cst_44 {dimension_numbers = #tpu.dot_dimension_numbers<[0], [0], [1], [1], [0, 1, 1, 1], [], []>} : vector<24x16xf32>, vector<24x32xf32>, vector<16x32xf32> -> vector<16x32xf32>
    %44 = arith.addf %43, %0 : vector<16x32xf32>
    %45 = arith.mulf %44, %36 : vector<16x32xf32>
    %c0_45 = arith.constant 0 : index
    %c0_46 = arith.constant 0 : index
    %46 = vector.load %arg8[%c0_45, %c0_46] : memref<16x128xf32, #tpu.memory_space<vmem>>, vector<16x32xf32>
    tpu.vector_store %arg8[%c0_45, %c0_46], %45 {strides = array<i32>} : memref<16x128xf32, #tpu.memory_space<vmem>>, vector<16x32xf32>,
    %c0_47 = arith.constant 0 : index
    %c32 = arith.constant 32 : index
    %47 = vector.load %arg8[%c0_47, %c32] : memref<16x128xf32, #tpu.memory_space<vmem>>, vector<16x32xf32>
    tpu.vector_store %arg8[%c0_47, %c32], %41 {strides = array<i32>} : memref<16x128xf32, #tpu.memory_space<vmem>>, vector<16x32xf32>,
    %48 = arith.mulf %45, %41 : vector<16x32xf32>
    %c0_48 = arith.constant 0 : index
    %c64 = arith.constant 64 : index
    %49 = vector.load %arg8[%c0_48, %c64] : memref<16x128xf32, #tpu.memory_space<vmem>>, vector<16x32xf32>
    tpu.vector_store %arg8[%c0_48, %c64], %48 {strides = array<i32>} : memref<16x128xf32, #tpu.memory_space<vmem>>, vector<16x32xf32>,
    %50 = arith.subf %45, %41 : vector<16x32xf32>
    %c0_49 = arith.constant 0 : index
    %c96 = arith.constant 96 : index
    %51 = vector.load %arg8[%c0_49, %c96] : memref<16x128xf32, #tpu.memory_space<vmem>>, vector<16x32xf32>
    tpu.vector_store %arg8[%c0_49, %c96], %50 {strides = array<i32>} : memref<16x128xf32, #tpu.memory_space<vmem>>, vector<16x32xf32>,
    %c0_50 = arith.constant 0 : index
    %c0_51 = arith.constant 0 : index
    %52 = vector.load %arg8[%c0_50, %c0_51] : memref<16x128xf32, #tpu.memory_space<vmem>>, vector<16x128xf32>
    %cst_52 = arith.constant dense<0.000000e+00> : vector<16x32xf32>
    %53 = tpu.matmul %52, %1, %cst_52 {dimension_numbers = #tpu.dot_dimension_numbers<[1], [0], [0], [1], [0, 0, 1, 1], [], []>} : vector<16x128xf32>, vector<128x32xf32>, vector<16x32xf32> -> vector<16x32xf32>
    %54 = vector.broadcast %2 : vector<1x32xf32> to vector<16x32xf32>
    %55 = arith.addf %53, %54 : vector<16x32xf32>
    %56 = arith.negf %55 : vector<16x32xf32>
    %57 = math.exp %56 : vector<16x32xf32>
    %cst_53 = arith.constant 1.000000e+00 : f32
    %58 = vector.broadcast %cst_53 : f32 to vector<16x32xf32>
    %59 = arith.addf %58, %57 : vector<16x32xf32>
    %60 = arith.divf %58, %59 : vector<16x32xf32>
    %cst_54 = arith.constant 1.000000e+00 : f32
    %61 = vector.broadcast %cst_54 : f32 to vector<16x32xf32>
    %62 = arith.subf %61, %60 : vector<16x32xf32>
    %63 = arith.mulf %62, %45 : vector<16x32xf32>
    %64 = arith.mulf %60, %41 : vector<16x32xf32>
    %65 = arith.addf %63, %64 : vector<16x32xf32>
    %cst_55 = arith.constant dense<0.000000e+00> : vector<16x64xf32>
    %66 = tpu.matmul %0, %3, %cst_55 {dimension_numbers = #tpu.dot_dimension_numbers<[1], [0], [0], [1], [0, 0, 1, 1], [], []>} : vector<16x32xf32>, vector<32x64xf32>, vector<16x64xf32> -> vector<16x64xf32>
    %cst_56 = arith.constant dense<0.000000e+00> : vector<16x96xf32>
    %67 = tpu.matmul %65, %4, %cst_56 {dimension_numbers = #tpu.dot_dimension_numbers<[1], [0], [0], [1], [0, 0, 1, 1], [], []>} : vector<16x32xf32>, vector<32x96xf32>, vector<16x96xf32> -> vector<16x96xf32>
    %68 = vector.extract_strided_slice %66 {offsets = [0, 0], sizes = [16, 32], strides = [1, 1]} : vector<16x64xf32> to vector<16x32xf32>
    %69 = vector.extract_strided_slice %67 {offsets = [0, 0], sizes = [16, 32], strides = [1, 1]} : vector<16x96xf32> to vector<16x32xf32>
    %70 = arith.addf %68, %69 : vector<16x32xf32>
    %71 = arith.negf %70 : vector<16x32xf32>
    %72 = math.exp %71 : vector<16x32xf32>
    %cst_57 = arith.constant 1.000000e+00 : f32
    %73 = vector.broadcast %cst_57 : f32 to vector<16x32xf32>
    %74 = arith.addf %73, %72 : vector<16x32xf32>
    %75 = arith.divf %73, %74 : vector<16x32xf32>
    %76 = vector.extract_strided_slice %66 {offsets = [0, 32], sizes = [16, 32], strides = [1, 1]} : vector<16x64xf32> to vector<16x32xf32>
    %77 = vector.extract_strided_slice %67 {offsets = [0, 32], sizes = [16, 32], strides = [1, 1]} : vector<16x96xf32> to vector<16x32xf32>
    %78 = arith.addf %76, %77 : vector<16x32xf32>
    %79 = arith.negf %78 : vector<16x32xf32>
    %80 = math.exp %79 : vector<16x32xf32>
    %cst_58 = arith.constant 1.000000e+00 : f32
    %81 = vector.broadcast %cst_58 : f32 to vector<16x32xf32>
    %82 = arith.addf %81, %80 : vector<16x32xf32>
    %83 = arith.divf %81, %82 : vector<16x32xf32>
    %84 = arith.mulf %83, %0 : vector<16x32xf32>
    %cst_59 = arith.constant dense<0.000000e+00> : vector<16x32xf32>
    %85 = tpu.matmul %84, %5, %cst_59 {dimension_numbers = #tpu.dot_dimension_numbers<[1], [0], [0], [1], [0, 0, 1, 1], [], []>} : vector<16x32xf32>, vector<32x32xf32>, vector<16x32xf32> -> vector<16x32xf32>
    %86 = vector.extract_strided_slice %67 {offsets = [0, 64], sizes = [16, 32], strides = [1, 1]} : vector<16x96xf32> to vector<16x32xf32>
    %87 = arith.addf %85, %86 : vector<16x32xf32>
    %88 = math.tanh %87 : vector<16x32xf32>
    %cst_60 = arith.constant 1.000000e+00 : f32
    %89 = vector.broadcast %cst_60 : f32 to vector<16x32xf32>
    %90 = arith.subf %89, %75 : vector<16x32xf32>
    %91 = arith.mulf %90, %0 : vector<16x32xf32>
    %92 = arith.mulf %75, %88 : vector<16x32xf32>
    %93 = arith.addf %91, %92 : vector<16x32xf32>
    %cst_61 = arith.constant dense<0.000000e+00> : vector<24x32xf32>
    %94 = tpu.matmul %23, %93, %cst_61 {dimension_numbers = #tpu.dot_dimension_numbers<[1], [0], [0], [1], [0, 0, 1, 1], [], []>} : vector<24x16xf32>, vector<16x32xf32>, vector<24x32xf32> -> vector<24x32xf32>
    %cst_62 = arith.constant dense<0.000000e+00> : vector<16x32xf32>
    %95 = tpu.matmul %24, %94, %cst_62 {dimension_numbers = #tpu.dot_dimension_numbers<[1], [0], [0], [1], [0, 0, 1, 1], [], []>} : vector<16x24xf32>, vector<24x32xf32>, vector<16x32xf32> -> vector<16x32xf32>
    %96 = arith.addf %95, %93 : vector<16x32xf32>
    %97 = vector.broadcast %30 : vector<16x1xf32> to vector<16x32xf32>
    %98 = arith.mulf %96, %97 : vector<16x32xf32>
    %cst_63 = arith.constant dense<0.000000e+00> : vector<24x32xf32>
    %99 = tpu.matmul %24, %93, %cst_63 {dimension_numbers = #tpu.dot_dimension_numbers<[0], [0], [1], [1], [0, 1, 1, 1], [], []>} : vector<16x24xf32>, vector<16x32xf32>, vector<24x32xf32> -> vector<24x32xf32>
    %cst_64 = arith.constant dense<0.000000e+00> : vector<16x32xf32>
    %100 = tpu.matmul %23, %99, %cst_64 {dimension_numbers = #tpu.dot_dimension_numbers<[0], [0], [1], [1], [0, 1, 1, 1], [], []>} : vector<24x16xf32>, vector<24x32xf32>, vector<16x32xf32> -> vector<16x32xf32>
    %101 = arith.addf %100, %93 : vector<16x32xf32>
    %102 = arith.mulf %101, %36 : vector<16x32xf32>
    %c0_65 = arith.constant 0 : index
    %c0_66 = arith.constant 0 : index
    %103 = vector.load %arg8[%c0_65, %c0_66] : memref<16x128xf32, #tpu.memory_space<vmem>>, vector<16x32xf32>
    tpu.vector_store %arg8[%c0_65, %c0_66], %102 {strides = array<i32>} : memref<16x128xf32, #tpu.memory_space<vmem>>, vector<16x32xf32>,
    %c0_67 = arith.constant 0 : index
    %c32_68 = arith.constant 32 : index
    %104 = vector.load %arg8[%c0_67, %c32_68] : memref<16x128xf32, #tpu.memory_space<vmem>>, vector<16x32xf32>
    tpu.vector_store %arg8[%c0_67, %c32_68], %98 {strides = array<i32>} : memref<16x128xf32, #tpu.memory_space<vmem>>, vector<16x32xf32>,
    %105 = arith.mulf %102, %98 : vector<16x32xf32>
    %c0_69 = arith.constant 0 : index
    %c64_70 = arith.constant 64 : index
    %106 = vector.load %arg8[%c0_69, %c64_70] : memref<16x128xf32, #tpu.memory_space<vmem>>, vector<16x32xf32>
    tpu.vector_store %arg8[%c0_69, %c64_70], %105 {strides = array<i32>} : memref<16x128xf32, #tpu.memory_space<vmem>>, vector<16x32xf32>,
    %107 = arith.subf %102, %98 : vector<16x32xf32>
    %c0_71 = arith.constant 0 : index
    %c96_72 = arith.constant 96 : index
    %108 = vector.load %arg8[%c0_71, %c96_72] : memref<16x128xf32, #tpu.memory_space<vmem>>, vector<16x32xf32>
    tpu.vector_store %arg8[%c0_71, %c96_72], %107 {strides = array<i32>} : memref<16x128xf32, #tpu.memory_space<vmem>>, vector<16x32xf32>,
    %c0_73 = arith.constant 0 : index
    %c0_74 = arith.constant 0 : index
    %109 = vector.load %arg8[%c0_73, %c0_74] : memref<16x128xf32, #tpu.memory_space<vmem>>, vector<16x128xf32>
    %cst_75 = arith.constant dense<0.000000e+00> : vector<16x32xf32>
    %110 = tpu.matmul %109, %1, %cst_75 {dimension_numbers = #tpu.dot_dimension_numbers<[1], [0], [0], [1], [0, 0, 1, 1], [], []>} : vector<16x128xf32>, vector<128x32xf32>, vector<16x32xf32> -> vector<16x32xf32>
    %111 = vector.broadcast %2 : vector<1x32xf32> to vector<16x32xf32>
    %112 = arith.addf %110, %111 : vector<16x32xf32>
    %113 = arith.negf %112 : vector<16x32xf32>
    %114 = math.exp %113 : vector<16x32xf32>
    %cst_76 = arith.constant 1.000000e+00 : f32
    %115 = vector.broadcast %cst_76 : f32 to vector<16x32xf32>
    %116 = arith.addf %115, %114 : vector<16x32xf32>
    %117 = arith.divf %115, %116 : vector<16x32xf32>
    %cst_77 = arith.constant 1.000000e+00 : f32
    %118 = vector.broadcast %cst_77 : f32 to vector<16x32xf32>
    %119 = arith.subf %118, %117 : vector<16x32xf32>
    %120 = arith.mulf %119, %102 : vector<16x32xf32>
    %121 = arith.mulf %117, %98 : vector<16x32xf32>
    %122 = arith.addf %120, %121 : vector<16x32xf32>
    %cst_78 = arith.constant dense<0.000000e+00> : vector<16x64xf32>
    %123 = tpu.matmul %93, %3, %cst_78 {dimension_numbers = #tpu.dot_dimension_numbers<[1], [0], [0], [1], [0, 0, 1, 1], [], []>} : vector<16x32xf32>, vector<32x64xf32>, vector<16x64xf32> -> vector<16x64xf32>
    %cst_79 = arith.constant dense<0.000000e+00> : vector<16x96xf32>
    %124 = tpu.matmul %122, %4, %cst_79 {dimension_numbers = #tpu.dot_dimension_numbers<[1], [0], [0], [1], [0, 0, 1, 1], [], []>} : vector<16x32xf32>, vector<32x96xf32>, vector<16x96xf32> -> vector<16x96xf32>
    %125 = vector.extract_strided_slice %123 {offsets = [0, 0], sizes = [16, 32], strides = [1, 1]} : vector<16x64xf32> to vector<16x32xf32>
    %126 = vector.extract_strided_slice %124 {offsets = [0, 0], sizes = [16, 32], strides = [1, 1]} : vector<16x96xf32> to vector<16x32xf32>
    %127 = arith.addf %125, %126 : vector<16x32xf32>
    %128 = arith.negf %127 : vector<16x32xf32>
    %129 = math.exp %128 : vector<16x32xf32>
    %cst_80 = arith.constant 1.000000e+00 : f32
    %130 = vector.broadcast %cst_80 : f32 to vector<16x32xf32>
    %131 = arith.addf %130, %129 : vector<16x32xf32>
    %132 = arith.divf %130, %131 : vector<16x32xf32>
    %133 = vector.extract_strided_slice %123 {offsets = [0, 32], sizes = [16, 32], strides = [1, 1]} : vector<16x64xf32> to vector<16x32xf32>
    %134 = vector.extract_strided_slice %124 {offsets = [0, 32], sizes = [16, 32], strides = [1, 1]} : vector<16x96xf32> to vector<16x32xf32>
    %135 = arith.addf %133, %134 : vector<16x32xf32>
    %136 = arith.negf %135 : vector<16x32xf32>
    %137 = math.exp %136 : vector<16x32xf32>
    %cst_81 = arith.constant 1.000000e+00 : f32
    %138 = vector.broadcast %cst_81 : f32 to vector<16x32xf32>
    %139 = arith.addf %138, %137 : vector<16x32xf32>
    %140 = arith.divf %138, %139 : vector<16x32xf32>
    %141 = arith.mulf %140, %93 : vector<16x32xf32>
    %cst_82 = arith.constant dense<0.000000e+00> : vector<16x32xf32>
    %142 = tpu.matmul %141, %5, %cst_82 {dimension_numbers = #tpu.dot_dimension_numbers<[1], [0], [0], [1], [0, 0, 1, 1], [], []>} : vector<16x32xf32>, vector<32x32xf32>, vector<16x32xf32> -> vector<16x32xf32>
    %143 = vector.extract_strided_slice %124 {offsets = [0, 64], sizes = [16, 32], strides = [1, 1]} : vector<16x96xf32> to vector<16x32xf32>
    %144 = arith.addf %142, %143 : vector<16x32xf32>
    %145 = math.tanh %144 : vector<16x32xf32>
    %cst_83 = arith.constant 1.000000e+00 : f32
    %146 = vector.broadcast %cst_83 : f32 to vector<16x32xf32>
    %147 = arith.subf %146, %132 : vector<16x32xf32>
    %148 = arith.mulf %147, %93 : vector<16x32xf32>
    %149 = arith.mulf %132, %145 : vector<16x32xf32>
    %150 = arith.addf %148, %149 : vector<16x32xf32>
    %151 = vector.extract_strided_slice %150 {offsets = [0, 0], sizes = [1, 32], strides = [1, 1]} : vector<16x32xf32> to vector<1x32xf32>
    %c0_84 = arith.constant 0 : index
    %c0_85 = arith.constant 0 : index
    %152 = vector.load %arg4[%c0_84, %c0_85] : memref<16x32xf32, #tpu.memory_space<vmem>>, vector<1x32xf32>
    tpu.vector_store %arg4[%c0_84, %c0_85], %151 {strides = array<i32>} : memref<16x32xf32, #tpu.memory_space<vmem>>, vector<1x32xf32>,
    %153 = vector.extract_strided_slice %150 {offsets = [1, 0], sizes = [1, 32], strides = [1, 1]} : vector<16x32xf32> to vector<1x32xf32>
    %c2 = arith.constant 2 : index
    %c0_86 = arith.constant 0 : index
    %154 = vector.load %arg4[%c2, %c0_86] : memref<16x32xf32, #tpu.memory_space<vmem>>, vector<1x32xf32>
    tpu.vector_store %arg4[%c2, %c0_86], %153 {strides = array<i32>} : memref<16x32xf32, #tpu.memory_space<vmem>>, vector<1x32xf32>,
    %155 = vector.extract_strided_slice %150 {offsets = [2, 0], sizes = [1, 32], strides = [1, 1]} : vector<16x32xf32> to vector<1x32xf32>
    %c4 = arith.constant 4 : index
    %c0_87 = arith.constant 0 : index
    %156 = vector.load %arg4[%c4, %c0_87] : memref<16x32xf32, #tpu.memory_space<vmem>>, vector<1x32xf32>
    tpu.vector_store %arg4[%c4, %c0_87], %155 {strides = array<i32>} : memref<16x32xf32, #tpu.memory_space<vmem>>, vector<1x32xf32>,
    %157 = vector.extract_strided_slice %150 {offsets = [3, 0], sizes = [1, 32], strides = [1, 1]} : vector<16x32xf32> to vector<1x32xf32>
    %c6 = arith.constant 6 : index
    %c0_88 = arith.constant 0 : index
    %158 = vector.load %arg4[%c6, %c0_88] : memref<16x32xf32, #tpu.memory_space<vmem>>, vector<1x32xf32>
    tpu.vector_store %arg4[%c6, %c0_88], %157 {strides = array<i32>} : memref<16x32xf32, #tpu.memory_space<vmem>>, vector<1x32xf32>,
    %159 = vector.extract_strided_slice %150 {offsets = [4, 0], sizes = [1, 32], strides = [1, 1]} : vector<16x32xf32> to vector<1x32xf32>
    %c8_89 = arith.constant 8 : index
    %c0_90 = arith.constant 0 : index
    %160 = vector.load %arg4[%c8_89, %c0_90] : memref<16x32xf32, #tpu.memory_space<vmem>>, vector<1x32xf32>
    tpu.vector_store %arg4[%c8_89, %c0_90], %159 {strides = array<i32>} : memref<16x32xf32, #tpu.memory_space<vmem>>, vector<1x32xf32>,
    %161 = vector.extract_strided_slice %150 {offsets = [5, 0], sizes = [1, 32], strides = [1, 1]} : vector<16x32xf32> to vector<1x32xf32>
    %c10 = arith.constant 10 : index
    %c0_91 = arith.constant 0 : index
    %162 = vector.load %arg4[%c10, %c0_91] : memref<16x32xf32, #tpu.memory_space<vmem>>, vector<1x32xf32>
    tpu.vector_store %arg4[%c10, %c0_91], %161 {strides = array<i32>} : memref<16x32xf32, #tpu.memory_space<vmem>>, vector<1x32xf32>,
    %163 = vector.extract_strided_slice %150 {offsets = [6, 0], sizes = [1, 32], strides = [1, 1]} : vector<16x32xf32> to vector<1x32xf32>
    %c12_92 = arith.constant 12 : index
    %c0_93 = arith.constant 0 : index
    %164 = vector.load %arg4[%c12_92, %c0_93] : memref<16x32xf32, #tpu.memory_space<vmem>>, vector<1x32xf32>
    tpu.vector_store %arg4[%c12_92, %c0_93], %163 {strides = array<i32>} : memref<16x32xf32, #tpu.memory_space<vmem>>, vector<1x32xf32>,
    %165 = vector.extract_strided_slice %150 {offsets = [7, 0], sizes = [1, 32], strides = [1, 1]} : vector<16x32xf32> to vector<1x32xf32>
    %c14 = arith.constant 14 : index
    %c0_94 = arith.constant 0 : index
    %166 = vector.load %arg4[%c14, %c0_94] : memref<16x32xf32, #tpu.memory_space<vmem>>, vector<1x32xf32>
    tpu.vector_store %arg4[%c14, %c0_94], %165 {strides = array<i32>} : memref<16x32xf32, #tpu.memory_space<vmem>>, vector<1x32xf32>,
    %167 = vector.extract_strided_slice %150 {offsets = [8, 0], sizes = [1, 32], strides = [1, 1]} : vector<16x32xf32> to vector<1x32xf32>
    %c1_95 = arith.constant 1 : index
    %c0_96 = arith.constant 0 : index
    %168 = vector.load %arg4[%c1_95, %c0_96] : memref<16x32xf32, #tpu.memory_space<vmem>>, vector<1x32xf32>
    tpu.vector_store %arg4[%c1_95, %c0_96], %167 {strides = array<i32>} : memref<16x32xf32, #tpu.memory_space<vmem>>, vector<1x32xf32>,
    %169 = vector.extract_strided_slice %150 {offsets = [9, 0], sizes = [1, 32], strides = [1, 1]} : vector<16x32xf32> to vector<1x32xf32>
    %c3 = arith.constant 3 : index
    %c0_97 = arith.constant 0 : index
    %170 = vector.load %arg4[%c3, %c0_97] : memref<16x32xf32, #tpu.memory_space<vmem>>, vector<1x32xf32>
    tpu.vector_store %arg4[%c3, %c0_97], %169 {strides = array<i32>} : memref<16x32xf32, #tpu.memory_space<vmem>>, vector<1x32xf32>,
    %171 = vector.extract_strided_slice %150 {offsets = [10, 0], sizes = [1, 32], strides = [1, 1]} : vector<16x32xf32> to vector<1x32xf32>
    %c5 = arith.constant 5 : index
    %c0_98 = arith.constant 0 : index
    %172 = vector.load %arg4[%c5, %c0_98] : memref<16x32xf32, #tpu.memory_space<vmem>>, vector<1x32xf32>
    tpu.vector_store %arg4[%c5, %c0_98], %171 {strides = array<i32>} : memref<16x32xf32, #tpu.memory_space<vmem>>, vector<1x32xf32>,
    %173 = vector.extract_strided_slice %150 {offsets = [11, 0], sizes = [1, 32], strides = [1, 1]} : vector<16x32xf32> to vector<1x32xf32>
    %c7 = arith.constant 7 : index
    %c0_99 = arith.constant 0 : index
    %174 = vector.load %arg4[%c7, %c0_99] : memref<16x32xf32, #tpu.memory_space<vmem>>, vector<1x32xf32>
    tpu.vector_store %arg4[%c7, %c0_99], %173 {strides = array<i32>} : memref<16x32xf32, #tpu.memory_space<vmem>>, vector<1x32xf32>,
    %175 = vector.extract_strided_slice %150 {offsets = [12, 0], sizes = [1, 32], strides = [1, 1]} : vector<16x32xf32> to vector<1x32xf32>
    %c9 = arith.constant 9 : index
    %c0_100 = arith.constant 0 : index
    %176 = vector.load %arg4[%c9, %c0_100] : memref<16x32xf32, #tpu.memory_space<vmem>>, vector<1x32xf32>
    tpu.vector_store %arg4[%c9, %c0_100], %175 {strides = array<i32>} : memref<16x32xf32, #tpu.memory_space<vmem>>, vector<1x32xf32>,
    %177 = vector.extract_strided_slice %150 {offsets = [13, 0], sizes = [1, 32], strides = [1, 1]} : vector<16x32xf32> to vector<1x32xf32>
    %c11 = arith.constant 11 : index
    %c0_101 = arith.constant 0 : index
    %178 = vector.load %arg4[%c11, %c0_101] : memref<16x32xf32, #tpu.memory_space<vmem>>, vector<1x32xf32>
    tpu.vector_store %arg4[%c11, %c0_101], %177 {strides = array<i32>} : memref<16x32xf32, #tpu.memory_space<vmem>>, vector<1x32xf32>,
    %179 = vector.extract_strided_slice %150 {offsets = [14, 0], sizes = [1, 32], strides = [1, 1]} : vector<16x32xf32> to vector<1x32xf32>
    %c13 = arith.constant 13 : index
    %c0_102 = arith.constant 0 : index
    %180 = vector.load %arg4[%c13, %c0_102] : memref<16x32xf32, #tpu.memory_space<vmem>>, vector<1x32xf32>
    tpu.vector_store %arg4[%c13, %c0_102], %179 {strides = array<i32>} : memref<16x32xf32, #tpu.memory_space<vmem>>, vector<1x32xf32>,
    %181 = vector.extract_strided_slice %150 {offsets = [15, 0], sizes = [1, 32], strides = [1, 1]} : vector<16x32xf32> to vector<1x32xf32>
    %c15 = arith.constant 15 : index
    %c0_103 = arith.constant 0 : index
    %182 = vector.load %arg4[%c15, %c0_103] : memref<16x32xf32, #tpu.memory_space<vmem>>, vector<1x32xf32>
    tpu.vector_store %arg4[%c15, %c0_103], %181 {strides = array<i32>} : memref<16x32xf32, #tpu.memory_space<vmem>>, vector<1x32xf32>,
    %cst_104 = arith.constant dense<0.000000e+00> : vector<16x32xf32>
    %183 = tpu.matmul %150, %6, %cst_104 {dimension_numbers = #tpu.dot_dimension_numbers<[1], [0], [0], [1], [0, 0, 1, 1], [], []>} : vector<16x32xf32>, vector<32x32xf32>, vector<16x32xf32> -> vector<16x32xf32>
    %184 = vector.extract_strided_slice %183 {offsets = [0, 0], sizes = [8, 32], strides = [1, 1]} : vector<16x32xf32> to vector<8x32xf32>
    %cst_105 = arith.constant dense<0xFF800000> : vector<32xf32>
    %185 = vector.multi_reduction <maximumf>, %184, %cst_105 [0] : vector<8x32xf32> to vector<32xf32>
    %186 = vector.shape_cast %185 : vector<32xf32> to vector<1x32xf32>
    %c0_106 = arith.constant 0 : index
    %c0_107 = arith.constant 0 : index
    %187 = vector.load %arg5[%c0_106, %c0_107] : memref<2x32xf32, #tpu.memory_space<vmem>>, vector<1x32xf32>
    tpu.vector_store %arg5[%c0_106, %c0_107], %186 {strides = array<i32>} : memref<2x32xf32, #tpu.memory_space<vmem>>, vector<1x32xf32>,
    %188 = vector.extract_strided_slice %183 {offsets = [8, 0], sizes = [8, 32], strides = [1, 1]} : vector<16x32xf32> to vector<8x32xf32>
    %cst_108 = arith.constant dense<0xFF800000> : vector<32xf32>
    %189 = vector.multi_reduction <maximumf>, %188, %cst_108 [0] : vector<8x32xf32> to vector<32xf32>
    %190 = vector.shape_cast %189 : vector<32xf32> to vector<1x32xf32>
    %c1_109 = arith.constant 1 : index
    %c0_110 = arith.constant 0 : index
    %191 = vector.load %arg5[%c1_109, %c0_110] : memref<2x32xf32, #tpu.memory_space<vmem>>, vector<1x32xf32>
    tpu.vector_store %arg5[%c1_109, %c0_110], %190 {strides = array<i32>} : memref<2x32xf32, #tpu.memory_space<vmem>>, vector<1x32xf32>,
    return
  }
}

</mosaic_0001>

<llo_original>
// kernel: graphnn_forward.1
$region0: #{graphnn_forward.1}
  #allocation0 [shape = 'u32[]', space=smem, size = 0x4, offset = 0x4, fixed_abs, tag = 'smem constant byte address 0x4 - core index']
  #allocation1 [shape = 'u32[72,128]{1,0:T(1,128)}', space=vmem, size = 0x9000, scoped, tag = 'internal scratch']
  #allocation2 [shape = 'f32[24,16]{1,0:T(8,128)}', space=vmem, size = 0x3000, scoped, tag = 'scratch operand']
  #allocation3 [shape = 'f32[16,24]{1,0:T(8,128)}', space=vmem, size = 0x2000, scoped, tag = 'scratch operand']
  #allocation4 [shape = 'f32[16,128]{1,0:T(8,128)}', space=vmem, size = 0x2000, scoped, tag = 'scratch operand']
  %s0 = inlined_call_operand.vmem [shape: f32[16,32], index: 0, kind: input, shape index: {}]
  %s1 = inlined_call_operand.vmem [shape: f32[2,12,8], index: 1, kind: input, shape index: {}]
  %s2 = inlined_call_operand.vmem [shape: f32[2,8,12], index: 2, kind: input, shape index: {}]
  %s3 = inlined_call_operand.vmem [shape: f32[264,128], index: 3, kind: input, shape index: {}]
  %s4 = inlined_call_operand.hbm [shape: f32[16,32], index: 4, kind: output, shape index: {0}]
  %s5 = inlined_call_operand.hbm [shape: f32[2,32], index: 5, kind: output, shape index: {1}]
  %6 = xla_tuple %s4, %s5
  %s7 = sld [smem:[#allocation0]]
  $region34: #{graphnn_forward.1} parent=0
    _
  %s9 = ssub.s32 1, %s7
  %s10 = scalar_select 0, %s9, %s7
  $region1: #{graphnn_forward.1} parent=0
    #allocation5 [shape = 'u8[8192]{0}', space=vmem, size = 0x2000, scoped, tag = 'output window, operand 0, single buffered']
    #allocation6 [shape = 's32[1]{0}', space=sflag, size = 0x4, scoped, tag = 'scoped memory for graphnn_forward.1']
    #allocation7 [shape = 'u8[1024]{0}', space=vmem, size = 0x400, scoped, tag = 'output window, operand 1, single buffered']
    #allocation8 [shape = 's32[1]{0}', space=sflag, size = 0x4, scoped, tag = 'scoped memory for graphnn_forward.1']
    %11 = vsyncpa [#allocation6], 0
    %12 = vsyncpa [#allocation8], 0
    // Predicated region
    $region2: #{graphnn_forward.1} parent=1 // pred_check
      _
    $region3: #{graphnn_forward.1} parent=1 // pred_check_branch
      %14 = sbr.rel (0) target = $region5
    $region4: #{graphnn_forward.1} parent=1 // pred_region
      _
    $region5: #{graphnn_forward.1} parent=1 // pred_fallthru
      _
    // Predicated region
    $region6: #{graphnn_forward.1} parent=1 // pred_check
      _
    $region7: #{graphnn_forward.1} parent=1 // pred_check_branch
      %16 = sbr.rel (0) target = $region9
    $region8: #{graphnn_forward.1} parent=1 // pred_region
      _
    $region9: #{graphnn_forward.1} parent=1 // pred_fallthru
      _
    // Predicated region
    $region10: #{graphnn_forward.1} parent=1 // pred_check
      _
    $region11: #{graphnn_forward.1} parent=1 // pred_check_branch
      %18 = sbr.rel (0) target = $region13
    $region12: #{graphnn_forward.1} parent=1 // pred_region
      _
    $region13: #{graphnn_forward.1} parent=1 // pred_fallthru
      _
    // Predicated region
    $region14: #{graphnn_forward.1} parent=1 // pred_check
      _
    $region15: #{graphnn_forward.1} parent=1 // pred_check_branch
      %20 = sbr.rel (0) target = $region17
    $region16: #{graphnn_forward.1} parent=1 // pred_region
      _
    $region17: #{graphnn_forward.1} parent=1 // pred_fallthru
      _
    %v21 = vld [vmem:[%s0] sm:$0xff]
    %v22 = vld [vmem:[%s0 + $0x8] sm:$0xff]
    %v23 = vld [vmem:[%s3] sm:$0xff]
    %v24 = vld [vmem:[%s3 + $0x8] sm:$0xff]
    %v25 = vld [vmem:[%s3 + $0x10] sm:$0xff]
    %v26 = vld [vmem:[%s3 + $0x18] sm:$0xff]
    %v27 = vld [vmem:[%s3 + $0x20] sm:$0xff]
    %v28 = vld [vmem:[%s3 + $0x28] sm:$0xff]
    %v29 = vld [vmem:[%s3 + $0x30] sm:$0xff]
    %v30 = vld [vmem:[%s3 + $0x38] sm:$0xff]
    %v31 = vld [vmem:[%s3 + $0x40] sm:$0xff]
    %v32 = vld [vmem:[%s3 + $0x48] sm:$0xff]
    %v33 = vld [vmem:[%s3 + $0x50] sm:$0xff]
    %v34 = vld [vmem:[%s3 + $0x58] sm:$0xff]
    %v35 = vld [vmem:[%s3 + $0x60] sm:$0xff]
    %v36 = vld [vmem:[%s3 + $0x68] sm:$0xff]
    %v37 = vld [vmem:[%s3 + $0x70] sm:$0xff]
    %v38 = vld [vmem:[%s3 + $0x78] sm:$0xff]
    %v39 = vld [vmem:[%s3 + $0x80] sm:$0x1]
    %v40 = vld [vmem:[%s3 + $0x88] sm:$0xff]
    %v41 = vld [vmem:[%s3 + $0x90] sm:$0xff]
    %v42 = vld [vmem:[%s3 + $0x98] sm:$0xff]
    %v43 = vld [vmem:[%s3 + $0xa0] sm:$0xff]
    %v44 = vld [vmem:[%s3 + $0xa8] sm:$0xff]
    %v45 = vld [vmem:[%s3 + $0xb0] sm:$0xff]
    %v46 = vld [vmem:[%s3 + $0xb8] sm:$0xff]
    %v47 = vld [vmem:[%s3 + $0xc0] sm:$0xff]
    %v48 = vld [vmem:[%s3 + $0xc8] sm:$0xff]
    %v49 = vld [vmem:[%s3 + $0xd0] sm:$0xff]
    %v50 = vld [vmem:[%s3 + $0xd8] sm:$0xff]
    %v51 = vld [vmem:[%s3 + $0xe0] sm:$0xff]
    %v52 = vld [vmem:[%s3 + $0xe8] sm:$0xff]
    %v53 = vld [vmem:[%s3 + $0xf0] sm:$0xff]
    %v54 = vld [vmem:[%s3 + $0xf8] sm:$0xff]
    %v55 = vld [vmem:[%s3 + $0x100] sm:$0xff]
    %vm56 = vcmask 130048
    %57 = vst.msk [vmem:[#allocation2] sm:$0xff] %vm56, 0.0
    %58 = vst.msk [vmem:[#allocation2 + $0x8] sm:$0xff] %vm56, 0.0
    %59 = vst.msk [vmem:[#allocation2 + $0x10] sm:$0xff] %vm56, 0.0
    %v60 = vld [vmem:[%s1] sm:$0xff]
    %v61 = vld [vmem:[%s1 + $0x8] sm:$0xf]
    %vm62 = vcmask 64512
    %63 = vst.msk [vmem:[#allocation2] sm:$0xff] %vm62, %v60
    %vm64 = vcmask 60416
    %65 = vst.msk [vmem:[#allocation2 + $0x8] sm:$0xf] %vm64, %v61
    %s66 = scalar_lea.vmem %s1, 16
    %v67 = vld [vmem:[%s66] sm:$0xff]
    %v68 = vld [vmem:[%s66 + $0x8] sm:$0xf]
    %71 = vrot.lane.b32.xlu0 %v67, 8
    %v72 = vpop.permute.xlu0 %71
    %73 = vrot.lane.b32.xlu0 %v68, 8
    %v74 = vpop.permute.xlu0 %73
    %vm77 = vcmask 130112
    %78 = vst.msk [vmem:[#allocation2 + $0xc] sm:$0xff] %vm77, %v72
    %vm79 = vcmask 126016
    %80 = vst.msk [vmem:[#allocation2 + $0x14] sm:$0xf] %vm79, %v74
    %vm81 = vcmask 195584
    %82 = vst.msk [vmem:[#allocation3] sm:$0xff] %vm81, 0.0
    %83 = vst.msk [vmem:[#allocation3 + $0x8] sm:$0xff] %vm81, 0.0
    %v84 = vld [vmem:[%s2] sm:$0xff]
    %vm85 = vcmask 97280
    %86 = vst.msk [vmem:[#allocation3] sm:$0xff] %vm85, %v84
    %s87 = scalar_lea.vmem %s2, 8
    %v88 = vld [vmem:[%s87] sm:$0xff]
    %90 = vrot.lane.b32.xlu0 %v88, 12
    %v91 = vpop.permute.xlu0 %90
    %vm93 = vcmask 195680
    %94 = vst.msk [vmem:[#allocation3 + $0x8] sm:$0xff] %vm93, %v91
    %v95 = vld [vmem:[#allocation2] sm:$0xff]
    %v96 = vld [vmem:[#allocation2 + $0x8] sm:$0xff]
    %v97 = vld [vmem:[#allocation2 + $0x10] sm:$0xff]
    %v98 = vld [vmem:[#allocation3] sm:$0xff]
    %v99 = vld [vmem:[#allocation3 + $0x8] sm:$0xff]
    %v100 = vsel %vm81, %v98, 0.0
    %101 = vadd.xlane.f32.xlu0 %v100
    %v102 = vpop.xlane.xlu0 %101
    %v103 = vsel %vm81, %v99, 0.0
    %104 = vadd.xlane.f32.xlu0 %v103
    %v105 = vpop.xlane.xlu0 %104
    %v106 = vadd.f32 %v102, 1.0
    %v107 = vadd.f32 %v105, 1.0
    %v108 = vrcp.pop %v106
    %v109 = vmul.f32 %v106, %v108
    %v110 = vsub.f32 1.0, %v109
    %v111 = vmul.f32 %v108, %v110
    %v112 = vadd.f32 %v108, %v111
    %vm113 = vweird.f32 %v106
    %vm114 = vweird.f32 %v108
    %vm115 = vmor %vm113, %vm114
    %v116 = vsel %vm115, %v108, %v112
    %v117 = vand.u32 2147483647, %v106
    %vm118 = vcmp.eq.f32.partialorder %v117, 8.507059e+37
    %v119 = vand.u32 %v106, 2147483648
    %v120 = vor.u32 1.1754944e-38, %v119
    %v121 = vsel %vm118, %v120, %v116
    %v122 = vmul.f32 1.0, %v121
    %v123 = vrcp.pop %v107
    %v124 = vmul.f32 %v107, %v123
    %v125 = vsub.f32 1.0, %v124
    %v126 = vmul.f32 %v123, %v125
    %v127 = vadd.f32 %v123, %v126
    %vm128 = vweird.f32 %v107
    %vm129 = vweird.f32 %v123
    %vm130 = vmor %vm128, %vm129
    %v131 = vsel %vm130, %v123, %v127
    %v132 = vand.u32 2147483647, %v107
    %vm133 = vcmp.eq.f32.partialorder %v132, 8.507059e+37
    %v134 = vand.u32 %v107, 2147483648
    %v135 = vor.u32 1.1754944e-38, %v134
    %v136 = vsel %vm133, %v135, %v131
    %v137 = vmul.f32 1.0, %v136
    %138 = vxpose.xlu0.b32.start [1/16] %v95, 128
    %139 = vxpose.xlu0.b32.cont [2/16] %v96, 128
    %140 = vxpose.xlu0.b32.cont [3/16] %v97, 128
    %141 = vxpose.xlu0.b32.cont [4/16] 0.0, 128
    %142 = vxpose.xlu0.b32.cont [5/16] 0.0, 128
    %143 = vxpose.xlu0.b32.cont [6/16] 0.0, 128
    %144 = vxpose.xlu0.b32.cont [7/16] 0.0, 128
    %145 = vxpose.xlu0.b32.cont [8/16] 0.0, 128
    %146 = vxpose.xlu0.b32.cont [9/16] 0.0, 128
    %147 = vxpose.xlu0.b32.cont [10/16] 0.0, 128
    %148 = vxpose.xlu0.b32.cont [11/16] 0.0, 128
    %149 = vxpose.xlu0.b32.cont [12/16] 0.0, 128
    %150 = vxpose.xlu0.b32.cont [13/16] 0.0, 128
    %151 = vxpose.xlu0.b32.cont [14/16] 0.0, 128
    %152 = vxpose.xlu0.b32.cont [15/16] 0.0, 128
    %153 = vxpose.xlu0.b32.end [16/16] 0.0, 128
    %v154 = vpop.trf.xlu0
    %v155 = vpop.trf.xlu0
    %v156 = vpop.trf.xlu0
    %v157 = vpop.trf.xlu0
    %v158 = vpop.trf.xlu0
    %v159 = vpop.trf.xlu0
    %v160 = vpop.trf.xlu0
    %v161 = vpop.trf.xlu0
    %v162 = vpop.trf.xlu0
    %v163 = vpop.trf.xlu0
    %v164 = vpop.trf.xlu0
    %v165 = vpop.trf.xlu0
    %v166 = vpop.trf.xlu0
    %v167 = vpop.trf.xlu0
    %v168 = vpop.trf.xlu0
    %v169 = vpop.trf.xlu0
    %v171 = vsel %vm81, %v154, 0
    %v174 = vsel %vm81, %v155, 0
    %176 = vmatpush.msra.mxu0 0.0
    %177 = vmatpush.msra.mxu0 0.0
    %178 = vmatpush.msra.mxu0 0.0
    %179 = vmatpush.msra.mxu0 0.0
    %180 = vmatpush.msra.mxu0 0.0
    %181 = vmatpush.msra.mxu0 0.0
    %182 = vmatpush.msra.mxu0 0.0
    %183 = vmatpush.msra.mxu0 0.0
    %184 = vmatpush.msra.mxu0 0.0
    %185 = vmatpush.msra.mxu0 0.0
    %186 = vmatpush.msra.mxu0 0.0
    %187 = vmatpush.msra.mxu0 0.0
    %188 = vmatpush.msra.mxu0 0.0
    %189 = vmatpush.msra.mxu0 1.0
    %190 = vmatpush.msra.mxu0 1.0
    %191 = vmatpush.msra.mxu0 1.0
    %192 = vmatmul.f32.gmra.mxu0 %v171
    %v193 = vpop.f32.mrf.mxu0
    %v194 = vadd.f32 1.0, %v193
    %195 = vmatmul.f32.gmra.mxu0 %v174
    %v196 = vpop.f32.mrf.mxu0
    %v197 = vadd.f32 1.0, %v196
    %198 = vdwg.mxu0
    %v199 = vrcp.pop %v194
    %v200 = vmul.f32 %v194, %v199
    %v201 = vsub.f32 1.0, %v200
    %v202 = vmul.f32 %v199, %v201
    %v203 = vadd.f32 %v199, %v202
    %vm204 = vweird.f32 %v194
    %vm205 = vweird.f32 %v199
    %vm206 = vmor %vm204, %vm205
    %v207 = vsel %vm206, %v199, %v203
    %v208 = vand.u32 2147483647, %v194
    %vm209 = vcmp.eq.f32.partialorder %v208, 8.507059e+37
    %v210 = vand.u32 %v194, 2147483648
    %v211 = vor.u32 1.1754944e-38, %v210
    %v212 = vsel %vm209, %v211, %v207
    %v213 = vmul.f32 1.0, %v212
    %v214 = vrcp.pop %v197
    %v215 = vmul.f32 %v197, %v214
    %v216 = vsub.f32 1.0, %v215
    %v217 = vmul.f32 %v214, %v216
    %v218 = vadd.f32 %v214, %v217
    %vm219 = vweird.f32 %v197
    %vm220 = vweird.f32 %v214
    %vm221 = vmor %vm219, %vm220
    %v222 = vsel %vm221, %v214, %v218
    %v223 = vand.u32 2147483647, %v197
    %vm224 = vcmp.eq.f32.partialorder %v223, 8.507059e+37
    %v225 = vand.u32 %v197, 2147483648
    %v226 = vor.u32 1.1754944e-38, %v225
    %v227 = vsel %vm224, %v226, %v222
    %v228 = vmul.f32 1.0, %v227
    %v230 = vsel %vm56, %v95, 0
    %v233 = vsel %vm56, %v96, 0
    %v236 = vsel %vm56, %v97, 0
    %238 = vmatpush.msra.mxu0 0.0
    %239 = vmatpush.msra.mxu0 0.0
    %240 = vmatpush.msra.mxu0 0.0
    %241 = vmatpush.msra.mxu0 0.0
    %242 = vmatpush.msra.mxu0 0.0
    %243 = vmatpush.msra.mxu0 0.0
    %244 = vmatpush.msra.mxu0 0.0
    %245 = vmatpush.msra.mxu0 0.0
    %246 = vmatpush.msra.mxu0 0.0
    %247 = vmatpush.msra.mxu0 0.0
    %248 = vmatpush.msra.mxu0 0.0
    %249 = vmatpush.msra.mxu0 0.0
    %250 = vmatpush.msra.mxu0 0.0
    %251 = vmatpush.msra.mxu0 0.0
    %252 = vmatpush.msra.mxu0 %v22
    %253 = vmatpush.msra.mxu0 %v21
    %254 = vmatmul.f32.gmra.mxu0 %v230
    %v255 = vpop.f32.mrf.mxu0
    %v256 = vadd.f32 0.0, %v255
    %257 = vmatmul.f32.gmra.mxu0 %v233
    %v258 = vpop.f32.mrf.mxu0
    %v259 = vadd.f32 0.0, %v258
    %260 = vmatmul.f32.gmra.mxu0 %v236
    %v261 = vpop.f32.mrf.mxu0
    %v262 = vadd.f32 0.0, %v261
    %263 = vdwg.mxu0
    %v265 = vsel %vm81, %v98, 0
    %v268 = vsel %vm81, %v99, 0
    %270 = vmatpush.msra.mxu0 0.0
    %271 = vmatpush.msra.mxu0 0.0
    %272 = vmatpush.msra.mxu0 0.0
    %273 = vmatpush.msra.mxu0 0.0
    %274 = vmatpush.msra.mxu0 0.0
    %275 = vmatpush.msra.mxu0 0.0
    %276 = vmatpush.msra.mxu0 0.0
    %277 = vmatpush.msra.mxu0 0.0
    %278 = vmatpush.msra.mxu0 0.0
    %279 = vmatpush.msra.mxu0 0.0
    %280 = vmatpush.msra.mxu0 0.0
    %281 = vmatpush.msra.mxu0 0.0
    %282 = vmatpush.msra.mxu0 0.0
    %283 = vmatpush.msra.mxu0 %v262
    %284 = vmatpush.msra.mxu0 %v259
    %285 = vmatpush.msra.mxu0 %v256
    %286 = vmatmul.f32.gmra.mxu0 %v265
    %v287 = vpop.f32.mrf.mxu0
    %v288 = vadd.f32 %v21, %v287
    %289 = vmatmul.f32.gmra.mxu0 %v268
    %v290 = vpop.f32.mrf.mxu0
    %v291 = vadd.f32 %v22, %v290
    %292 = vdwg.mxu0
    %v293 = vmul.f32 %v288, %v122
    %v294 = vmul.f32 %v291, %v137
    %295 = vxpose.xlu0.b32.start [1/16] %v98, 128
    %296 = vxpose.xlu0.b32.cont [2/16] %v99, 128
    %297 = vxpose.xlu0.b32.cont [3/16] 0.0, 128
    %298 = vxpose.xlu0.b32.cont [4/16] 0.0, 128
    %299 = vxpose.xlu0.b32.cont [5/16] 0.0, 128
    %300 = vxpose.xlu0.b32.cont [6/16] 0.0, 128
    %301 = vxpose.xlu0.b32.cont [7/16] 0.0, 128
    %302 = vxpose.xlu0.b32.cont [8/16] 0.0, 128
    %303 = vxpose.xlu0.b32.cont [9/16] 0.0, 128
    %304 = vxpose.xlu0.b32.cont [10/16] 0.0, 128
    %305 = vxpose.xlu0.b32.cont [11/16] 0.0, 128
    %306 = vxpose.xlu0.b32.cont [12/16] 0.0, 128
    %307 = vxpose.xlu0.b32.cont [13/16] 0.0, 128
    %308 = vxpose.xlu0.b32.cont [14/16] 0.0, 128
    %309 = vxpose.xlu0.b32.cont [15/16] 0.0, 128
    %310 = vxpose.xlu0.b32.end [16/16] 0.0, 128
    %v311 = vpop.trf.xlu0
    %v312 = vpop.trf.xlu0
    %v313 = vpop.trf.xlu0
    %v314 = vpop.trf.xlu0
    %v315 = vpop.trf.xlu0
    %v316 = vpop.trf.xlu0
    %v317 = vpop.trf.xlu0
    %v318 = vpop.trf.xlu0
    %v319 = vpop.trf.xlu0
    %v320 = vpop.trf.xlu0
    %v321 = vpop.trf.xlu0
    %v322 = vpop.trf.xlu0
    %v323 = vpop.trf.xlu0
    %v324 = vpop.trf.xlu0
    %v325 = vpop.trf.xlu0
    %v326 = vpop.trf.xlu0
    %v328 = vsel %vm56, %v311, 0
    %v331 = vsel %vm56, %v312, 0
    %v334 = vsel %vm56, %v313, 0
    %336 = vmatpush.msra.mxu0 0.0
    %337 = vmatpush.msra.mxu0 0.0
    %338 = vmatpush.msra.mxu0 0.0
    %339 = vmatpush.msra.mxu0 0.0
    %340 = vmatpush.msra.mxu0 0.0
    %341 = vmatpush.msra.mxu0 0.0
    %342 = vmatpush.msra.mxu0 0.0
    %343 = vmatpush.msra.mxu0 0.0
    %344 = vmatpush.msra.mxu0 0.0
    %345 = vmatpush.msra.mxu0 0.0
    %346 = vmatpush.msra.mxu0 0.0
    %347 = vmatpush.msra.mxu0 0.0
    %348 = vmatpush.msra.mxu0 0.0
    %349 = vmatpush.msra.mxu0 0.0
    %350 = vmatpush.msra.mxu0 %v22
    %351 = vmatpush.msra.mxu0 %v21
    %352 = vmatmul.f32.gmra.mxu0 %v328
    %v353 = vpop.f32.mrf.mxu0
    %v354 = vadd.f32 0.0, %v353
    %355 = vmatmul.f32.gmra.mxu0 %v331
    %v356 = vpop.f32.mrf.mxu0
    %v357 = vadd.f32 0.0, %v356
    %358 = vmatmul.f32.gmra.mxu0 %v334
    %v359 = vpop.f32.mrf.mxu0
    %v360 = vadd.f32 0.0, %v359
    %361 = vdwg.mxu0
    %362 = vmatpush.msra.mxu0 0.0
    %363 = vmatpush.msra.mxu0 0.0
    %364 = vmatpush.msra.mxu0 0.0
    %365 = vmatpush.msra.mxu0 0.0
    %366 = vmatpush.msra.mxu0 0.0
    %367 = vmatpush.msra.mxu0 0.0
    %368 = vmatpush.msra.mxu0 0.0
    %369 = vmatpush.msra.mxu0 0.0
    %370 = vmatpush.msra.mxu0 0.0
    %371 = vmatpush.msra.mxu0 0.0
    %372 = vmatpush.msra.mxu0 0.0
    %373 = vmatpush.msra.mxu0 0.0
    %374 = vmatpush.msra.mxu0 0.0
    %375 = vmatpush.msra.mxu0 %v360
    %376 = vmatpush.msra.mxu0 %v357
    %377 = vmatpush.msra.mxu0 %v354
    %378 = vmatmul.f32.gmra.mxu0 %v171
    %v379 = vpop.f32.mrf.mxu0
    %v380 = vadd.f32 %v21, %v379
    %381 = vmatmul.f32.gmra.mxu0 %v174
    %v382 = vpop.f32.mrf.mxu0
    %v383 = vadd.f32 %v22, %v382
    %384 = vdwg.mxu0
    %v385 = vmul.f32 %v380, %v213
    %v386 = vmul.f32 %v383, %v228
    %vm387 = vcmask 261120
    %388 = vst.msk [vmem:[#allocation4] sm:$0xff] %vm387, %v385
    %389 = vst.msk [vmem:[#allocation4 + $0x8] sm:$0xff] %vm387, %v386
    %392 = vrot.lane.b32.xlu0 %v293, 32
    %v393 = vpop.permute.xlu0 %392
    %394 = vrot.lane.b32.xlu0 %v294, 32
    %v395 = vpop.permute.xlu0 %394
    %vm398 = vcmask 523520
    %399 = vst.msk [vmem:[#allocation4] sm:$0xff] %vm398, %v393
    %400 = vst.msk [vmem:[#allocation4 + $0x8] sm:$0xff] %vm398, %v395
    %v401 = vmul.f32 %v385, %v293
    %v402 = vmul.f32 %v386, %v294
    %405 = vrot.lane.b32.xlu0 %v401, 64
    %v406 = vpop.permute.xlu0 %405
    %407 = vrot.lane.b32.xlu0 %v402, 64
    %v408 = vpop.permute.xlu0 %407
    %vm411 = vcmask 785920
    %412 = vst.msk [vmem:[#allocation4] sm:$0xff] %vm411, %v406
    %413 = vst.msk [vmem:[#allocation4 + $0x8] sm:$0xff] %vm411, %v408
    %v414 = vsub.f32 %v385, %v293
    %v415 = vsub.f32 %v386, %v294
    %418 = vrot.lane.b32.xlu0 %v414, 96
    %v419 = vpop.permute.xlu0 %418
    %420 = vrot.lane.b32.xlu0 %v415, 96
    %v421 = vpop.permute.xlu0 %420
    %vm424 = vcmask 1048320
    %425 = vst.msk [vmem:[#allocation4] sm:$0xff] %vm424, %v419
    %426 = vst.msk [vmem:[#allocation4 + $0x8] sm:$0xff] %vm424, %v421
    %v427 = vld [vmem:[#allocation4] sm:$0xff]
    %v428 = vld [vmem:[#allocation4 + $0x8] sm:$0xff]
    %v429 = vperm.slane %v39, 0
    %430 = vmatpush.msra.mxu0 %v38
    %431 = vmatpush.msra.mxu0 %v37
    %432 = vmatpush.msra.mxu0 %v36
    %433 = vmatpush.msra.mxu0 %v35
    %434 = vmatpush.msra.mxu0 %v34
    %435 = vmatpush.msra.mxu0 %v33
    %436 = vmatpush.msra.mxu0 %v32
    %437 = vmatpush.msra.mxu0 %v31
    %438 = vmatpush.msra.mxu0 %v30
    %439 = vmatpush.msra.mxu0 %v29
    %440 = vmatpush.msra.mxu0 %v28
    %441 = vmatpush.msra.mxu0 %v27
    %442 = vmatpush.msra.mxu0 %v26
    %443 = vmatpush.msra.mxu0 %v25
    %444 = vmatpush.msra.mxu0 %v24
    %445 = vmatpush.msra.mxu0 %v23
    %446 = vmatmul.f32.gmra.mxu0 %v427
    %v447 = vpop.f32.mrf.mxu0
    %v448 = vadd.f32 %v429, %v447
    %449 = vmatmul.f32.gmra.mxu0 %v428
    %v450 = vpop.f32.mrf.mxu0
    %v451 = vadd.f32 %v429, %v450
    %452 = vdwg.mxu0
    %v453 = vxor.u32 %v448, 2147483648
    %v454 = vxor.u32 %v451, 2147483648
    %v455 = vmul.f32 %v453, 1.442695
    %v456 = vpow.pop %v455
    %v457 = vmul.f32 %v454, 1.442695
    %v458 = vpow.pop %v457
    %v459 = vadd.f32 %v456, 1.0
    %v460 = vadd.f32 %v458, 1.0
    %v461 = vrcp.pop %v459
    %v462 = vmul.f32 %v459, %v461
    %v463 = vsub.f32 1.0, %v462
    %v464 = vmul.f32 %v461, %v463
    %v465 = vadd.f32 %v461, %v464
    %vm466 = vweird.f32 %v459
    %vm467 = vweird.f32 %v461
    %vm468 = vmor %vm466, %vm467
    %v469 = vsel %vm468, %v461, %v465
    %v470 = vand.u32 2147483647, %v459
    %vm471 = vcmp.eq.f32.partialorder %v470, 8.507059e+37
    %v472 = vand.u32 %v459, 2147483648
    %v473 = vor.u32 1.1754944e-38, %v472
    %v474 = vsel %vm471, %v473, %v469
    %v475 = vmul.f32 1.0, %v474
    %v476 = vrcp.pop %v460
    %v477 = vmul.f32 %v460, %v476
    %v478 = vsub.f32 1.0, %v477
    %v479 = vmul.f32 %v476, %v478
    %v480 = vadd.f32 %v476, %v479
    %vm481 = vweird.f32 %v460
    %vm482 = vweird.f32 %v476
    %vm483 = vmor %vm481, %vm482
    %v484 = vsel %vm483, %v476, %v480
    %v485 = vand.u32 2147483647, %v460
    %vm486 = vcmp.eq.f32.partialorder %v485, 8.507059e+37
    %v487 = vand.u32 %v460, 2147483648
    %v488 = vor.u32 1.1754944e-38, %v487
    %v489 = vsel %vm486, %v488, %v484
    %v490 = vmul.f32 1.0, %v489
    %v491 = vsub.f32 1.0, %v475
    %v492 = vsub.f32 1.0, %v490
    %v493 = vmul.f32 %v491, %v385
    %v494 = vmul.f32 %v492, %v386
    %v495 = vmul.f32 %v475, %v293
    %v496 = vmul.f32 %v490, %v294
    %v497 = vadd.f32 %v493, %v495
    %v498 = vadd.f32 %v494, %v496
    %v500 = vsel %vm387, %v21, 0
    %v503 = vsel %vm387, %v22, 0
    %505 = vmatpush.msra.mxu0 0.0
    %506 = vmatpush.msra.mxu0 0.0
    %507 = vmatpush.msra.mxu0 0.0
    %508 = vmatpush.msra.mxu0 0.0
    %509 = vmatpush.msra.mxu0 0.0
    %510 = vmatpush.msra.mxu0 0.0
    %511 = vmatpush.msra.mxu0 0.0
    %512 = vmatpush.msra.mxu0 0.0
    %513 = vmatpush.msra.mxu0 0.0
    %514 = vmatpush.msra.mxu0 0.0
    %515 = vmatpush.msra.mxu0 0.0
    %516 = vmatpush.msra.mxu0 0.0
    %517 = vmatpush.msra.mxu0 %v43
    %518 = vmatpush.msra.mxu0 %v42
    %519 = vmatpush.msra.mxu0 %v41
    %520 = vmatpush.msra.mxu0 %v40
    %521 = vmatmul.f32.gmra.mxu0 %v500
    %v522 = vpop.f32.mrf.mxu0
    %v523 = vadd.f32 0.0, %v522
    %524 = vmatmul.f32.gmra.mxu0 %v503
    %v525 = vpop.f32.mrf.mxu0
    %v526 = vadd.f32 0.0, %v525
    %527 = vdwg.mxu0
    %v529 = vsel %vm387, %v497, 0
    %v532 = vsel %vm387, %v498, 0
    %534 = vmatpush.msra.mxu0 0.0
    %535 = vmatpush.msra.mxu0 0.0
    %536 = vmatpush.msra.mxu0 0.0
    %537 = vmatpush.msra.mxu0 0.0
    %538 = vmatpush.msra.mxu0 0.0
    %539 = vmatpush.msra.mxu0 0.0
    %540 = vmatpush.msra.mxu0 0.0
    %541 = vmatpush.msra.mxu0 0.0
    %542 = vmatpush.msra.mxu0 0.0
    %543 = vmatpush.msra.mxu0 0.0
    %544 = vmatpush.msra.mxu0 0.0
    %545 = vmatpush.msra.mxu0 0.0
    %546 = vmatpush.msra.mxu0 %v47
    %547 = vmatpush.msra.mxu0 %v46
    %548 = vmatpush.msra.mxu0 %v45
    %549 = vmatpush.msra.mxu0 %v44
    %550 = vmatmul.f32.gmra.mxu0 %v529
    %v551 = vpop.f32.mrf.mxu0
    %v552 = vadd.f32 0.0, %v551
    %553 = vmatmul.f32.gmra.mxu0 %v532
    %v554 = vpop.f32.mrf.mxu0
    %v555 = vadd.f32 0.0, %v554
    %556 = vdwg.mxu0
    %v557 = vadd.f32 %v523, %v552
    %v558 = vadd.f32 %v526, %v555
    %v559 = vxor.u32 %v557, 2147483648
    %v560 = vxor.u32 %v558, 2147483648
    %v561 = vmul.f32 %v559, 1.442695
    %v562 = vpow.pop %v561
    %v563 = vmul.f32 %v560, 1.442695
    %v564 = vpow.pop %v563
    %v565 = vadd.f32 %v562, 1.0
    %v566 = vadd.f32 %v564, 1.0
    %v567 = vrcp.pop %v565
    %v568 = vmul.f32 %v565, %v567
    %v569 = vsub.f32 1.0, %v568
    %v570 = vmul.f32 %v567, %v569
    %v571 = vadd.f32 %v567, %v570
    %vm572 = vweird.f32 %v565
    %vm573 = vweird.f32 %v567
    %vm574 = vmor %vm572, %vm573
    %v575 = vsel %vm574, %v567, %v571
    %v576 = vand.u32 2147483647, %v565
    %vm577 = vcmp.eq.f32.partialorder %v576, 8.507059e+37
    %v578 = vand.u32 %v565, 2147483648
    %v579 = vor.u32 1.1754944e-38, %v578
    %v580 = vsel %vm577, %v579, %v575
    %v581 = vmul.f32 1.0, %v580
    %v582 = vrcp.pop %v566
    %v583 = vmul.f32 %v566, %v582
    %v584 = vsub.f32 1.0, %v583
    %v585 = vmul.f32 %v582, %v584
    %v586 = vadd.f32 %v582, %v585
    %vm587 = vweird.f32 %v566
    %vm588 = vweird.f32 %v582
    %vm589 = vmor %vm587, %vm588
    %v590 = vsel %vm589, %v582, %v586
    %v591 = vand.u32 2147483647, %v566
    %vm592 = vcmp.eq.f32.partialorder %v591, 8.507059e+37
    %v593 = vand.u32 %v566, 2147483648
    %v594 = vor.u32 1.1754944e-38, %v593
    %v595 = vsel %vm592, %v594, %v590
    %v596 = vmul.f32 1.0, %v595
    %597 = vrot.lane.b32.xlu0 %v21, 32
    %v598 = vpop.permute.xlu0 %597
    %599 = vrot.lane.b32.xlu0 %v22, 32
    %v600 = vpop.permute.xlu0 %599
    %v603 = vmul.f32 %v581, %v598
    %v604 = vmul.f32 %v596, %v600
    %607 = vrot.lane.b32.xlu0 %v603, 96
    %v608 = vpop.permute.xlu0 %607
    %609 = vrot.lane.b32.xlu0 %v604, 96
    %v610 = vpop.permute.xlu0 %609
    %613 = vrot.lane.b32.xlu0 %v552, 64
    %v614 = vpop.permute.xlu0 %613
    %615 = vrot.lane.b32.xlu0 %v555, 64
    %v616 = vpop.permute.xlu0 %615
    %v619 = vsel %vm387, %v608, 0
    %v621 = vsel %vm387, %v610, 0
    %623 = vmatpush.msra.mxu0 0.0
    %624 = vmatpush.msra.mxu0 0.0
    %625 = vmatpush.msra.mxu0 0.0
    %626 = vmatpush.msra.mxu0 0.0
    %627 = vmatpush.msra.mxu0 0.0
    %628 = vmatpush.msra.mxu0 0.0
    %629 = vmatpush.msra.mxu0 0.0
    %630 = vmatpush.msra.mxu0 0.0
    %631 = vmatpush.msra.mxu0 0.0
    %632 = vmatpush.msra.mxu0 0.0
    %633 = vmatpush.msra.mxu0 0.0
    %634 = vmatpush.msra.mxu0 0.0
    %635 = vmatpush.msra.mxu0 %v51
    %636 = vmatpush.msra.mxu0 %v50
    %637 = vmatpush.msra.mxu0 %v49
    %638 = vmatpush.msra.mxu0 %v48
    %639 = vmatmul.f32.gmra.mxu0 %v619
    %v640 = vpop.f32.mrf.mxu0
    %v641 = vadd.f32 %v614, %v640
    %642 = vmatmul.f32.gmra.mxu0 %v621
    %v643 = vpop.f32.mrf.mxu0
    %v644 = vadd.f32 %v616, %v643
    %645 = vdwg.mxu0
    %v646 = vtanh.pop %v641
    %v647 = vtanh.pop %v644
    %v648 = vsub.f32 1.0, %v581
    %v649 = vsub.f32 1.0, %v596
    %v650 = vmul.f32 %v648, %v21
    %v651 = vmul.f32 %v649, %v22
    %v652 = vmul.f32 %v581, %v646
    %v653 = vmul.f32 %v596, %v647
    %v654 = vadd.f32 %v650, %v652
    %v655 = vadd.f32 %v651, %v653
    %656 = vmatpush.msra.mxu0 0.0
    %657 = vmatpush.msra.mxu0 0.0
    %658 = vmatpush.msra.mxu0 0.0
    %659 = vmatpush.msra.mxu0 0.0
    %660 = vmatpush.msra.mxu0 0.0
    %661 = vmatpush.msra.mxu0 0.0
    %662 = vmatpush.msra.mxu0 0.0
    %663 = vmatpush.msra.mxu0 0.0
    %664 = vmatpush.msra.mxu0 0.0
    %665 = vmatpush.msra.mxu0 0.0
    %666 = vmatpush.msra.mxu0 0.0
    %667 = vmatpush.msra.mxu0 0.0
    %668 = vmatpush.msra.mxu0 0.0
    %669 = vmatpush.msra.mxu0 0.0
    %670 = vmatpush.msra.mxu0 %v655
    %671 = vmatpush.msra.mxu0 %v654
    %672 = vmatmul.f32.gmra.mxu0 %v230
    %v673 = vpop.f32.mrf.mxu0
    %v674 = vadd.f32 0.0, %v673
    %675 = vmatmul.f32.gmra.mxu0 %v233
    %v676 = vpop.f32.mrf.mxu0
    %v677 = vadd.f32 0.0, %v676
    %678 = vmatmul.f32.gmra.mxu0 %v236
    %v679 = vpop.f32.mrf.mxu0
    %v680 = vadd.f32 0.0, %v679
    %681 = vdwg.mxu0
    %682 = vmatpush.msra.mxu0 0.0
    %683 = vmatpush.msra.mxu0 0.0
    %684 = vmatpush.msra.mxu0 0.0
    %685 = vmatpush.msra.mxu0 0.0
    %686 = vmatpush.msra.mxu0 0.0
    %687 = vmatpush.msra.mxu0 0.0
    %688 = vmatpush.msra.mxu0 0.0
    %689 = vmatpush.msra.mxu0 0.0
    %690 = vmatpush.msra.mxu0 0.0
    %691 = vmatpush.msra.mxu0 0.0
    %692 = vmatpush.msra.mxu0 0.0
    %693 = vmatpush.msra.mxu0 0.0
    %694 = vmatpush.msra.mxu0 0.0
    %695 = vmatpush.msra.mxu0 %v680
    %696 = vmatpush.msra.mxu0 %v677
    %697 = vmatpush.msra.mxu0 %v674
    %698 = vmatmul.f32.gmra.mxu0 %v265
    %v699 = vpop.f32.mrf.mxu0
    %v700 = vadd.f32 %v654, %v699
    %701 = vmatmul.f32.gmra.mxu0 %v268
    %v702 = vpop.f32.mrf.mxu0
    %v703 = vadd.f32 %v655, %v702
    %704 = vdwg.mxu0
    %v705 = vmul.f32 %v700, %v122
    %v706 = vmul.f32 %v703, %v137
    %707 = vmatpush.msra.mxu0 0.0
    %708 = vmatpush.msra.mxu0 0.0
    %709 = vmatpush.msra.mxu0 0.0
    %710 = vmatpush.msra.mxu0 0.0
    %711 = vmatpush.msra.mxu0 0.0
    %712 = vmatpush.msra.mxu0 0.0
    %713 = vmatpush.msra.mxu0 0.0
    %714 = vmatpush.msra.mxu0 0.0
    %715 = vmatpush.msra.mxu0 0.0
    %716 = vmatpush.msra.mxu0 0.0
    %717 = vmatpush.msra.mxu0 0.0
    %718 = vmatpush.msra.mxu0 0.0
    %719 = vmatpush.msra.mxu0 0.0
    %720 = vmatpush.msra.mxu0 0.0
    %721 = vmatpush.msra.mxu0 %v655
    %722 = vmatpush.msra.mxu0 %v654
    %723 = vmatmul.f32.gmra.mxu0 %v328
    %v724 = vpop.f32.mrf.mxu0
    %v725 = vadd.f32 0.0, %v724
    %726 = vmatmul.f32.gmra.mxu0 %v331
    %v727 = vpop.f32.mrf.mxu0
    %v728 = vadd.f32 0.0, %v727
    %729 = vmatmul.f32.gmra.mxu0 %v334
    %v730 = vpop.f32.mrf.mxu0
    %v731 = vadd.f32 0.0, %v730
    %732 = vdwg.mxu0
    %733 = vmatpush.msra.mxu0 0.0
    %734 = vmatpush.msra.mxu0 0.0
    %735 = vmatpush.msra.mxu0 0.0
    %736 = vmatpush.msra.mxu0 0.0
    %737 = vmatpush.msra.mxu0 0.0
    %738 = vmatpush.msra.mxu0 0.0
    %739 = vmatpush.msra.mxu0 0.0
    %740 = vmatpush.msra.mxu0 0.0
    %741 = vmatpush.msra.mxu0 0.0
    %742 = vmatpush.msra.mxu0 0.0
    %743 = vmatpush.msra.mxu0 0.0
    %744 = vmatpush.msra.mxu0 0.0
    %745 = vmatpush.msra.mxu0 0.0
    %746 = vmatpush.msra.mxu0 %v731
    %747 = vmatpush.msra.mxu0 %v728
    %748 = vmatpush.msra.mxu0 %v725
    %749 = vmatmul.f32.gmra.mxu0 %v171
    %v750 = vpop.f32.mrf.mxu0
    %v751 = vadd.f32 %v654, %v750
    %752 = vmatmul.f32.gmra.mxu0 %v174
    %v753 = vpop.f32.mrf.mxu0
    %v754 = vadd.f32 %v655, %v753
    %755 = vdwg.mxu0
    %v756 = vmul.f32 %v751, %v213
    %v757 = vmul.f32 %v754, %v228
    %758 = vst.msk [vmem:[#allocation4] sm:$0xff] %vm387, %v756
    %759 = vst.msk [vmem:[#allocation4 + $0x8] sm:$0xff] %vm387, %v757
    %762 = vrot.lane.b32.xlu0 %v705, 32
    %v763 = vpop.permute.xlu0 %762
    %764 = vrot.lane.b32.xlu0 %v706, 32
    %v765 = vpop.permute.xlu0 %764
    %768 = vst.msk [vmem:[#allocation4] sm:$0xff] %vm398, %v763
    %769 = vst.msk [vmem:[#allocation4 + $0x8] sm:$0xff] %vm398, %v765
    %v770 = vmul.f32 %v756, %v705
    %v771 = vmul.f32 %v757, %v706
    %774 = vrot.lane.b32.xlu0 %v770, 64
    %v775 = vpop.permute.xlu0 %774
    %776 = vrot.lane.b32.xlu0 %v771, 64
    %v777 = vpop.permute.xlu0 %776
    %780 = vst.msk [vmem:[#allocation4] sm:$0xff] %vm411, %v775
    %781 = vst.msk [vmem:[#allocation4 + $0x8] sm:$0xff] %vm411, %v777
    %v782 = vsub.f32 %v756, %v705
    %v783 = vsub.f32 %v757, %v706
    %786 = vrot.lane.b32.xlu0 %v782, 96
    %v787 = vpop.permute.xlu0 %786
    %788 = vrot.lane.b32.xlu0 %v783, 96
    %v789 = vpop.permute.xlu0 %788
    %792 = vst.msk [vmem:[#allocation4] sm:$0xff] %vm424, %v787
    %793 = vst.msk [vmem:[#allocation4 + $0x8] sm:$0xff] %vm424, %v789
    %v794 = vld [vmem:[#allocation4] sm:$0xff]
    %v795 = vld [vmem:[#allocation4 + $0x8] sm:$0xff]
    %796 = vmatpush.msra.mxu0 %v38
    %797 = vmatpush.msra.mxu0 %v37
    %798 = vmatpush.msra.mxu0 %v36
    %799 = vmatpush.msra.mxu0 %v35
    %800 = vmatpush.msra.mxu0 %v34
    %801 = vmatpush.msra.mxu0 %v33
    %802 = vmatpush.msra.mxu0 %v32
    %803 = vmatpush.msra.mxu0 %v31
    %804 = vmatpush.msra.mxu0 %v30
    %805 = vmatpush.msra.mxu0 %v29
    %806 = vmatpush.msra.mxu0 %v28
    %807 = vmatpush.msra.mxu0 %v27
    %808 = vmatpush.msra.mxu0 %v26
    %809 = vmatpush.msra.mxu0 %v25
    %810 = vmatpush.msra.mxu0 %v24
    %811 = vmatpush.msra.mxu0 %v23
    %812 = vmatmul.f32.gmra.mxu0 %v794
    %v813 = vpop.f32.mrf.mxu0
    %v814 = vadd.f32 %v429, %v813
    %815 = vmatmul.f32.gmra.mxu0 %v795
    %v816 = vpop.f32.mrf.mxu0
    %v817 = vadd.f32 %v429, %v816
    %818 = vdwg.mxu0
    %v819 = vxor.u32 %v814, 2147483648
    %v820 = vxor.u32 %v817, 2147483648
    %v821 = vmul.f32 %v819, 1.442695
    %v822 = vpow.pop %v821
    %v823 = vmul.f32 %v820, 1.442695
    %v824 = vpow.pop %v823
    %v825 = vadd.f32 %v822, 1.0
    %v826 = vadd.f32 %v824, 1.0
    %v827 = vrcp.pop %v825
    %v828 = vmul.f32 %v825, %v827
    %v829 = vsub.f32 1.0, %v828
    %v830 = vmul.f32 %v827, %v829
    %v831 = vadd.f32 %v827, %v830
    %vm832 = vweird.f32 %v825
    %vm833 = vweird.f32 %v827
    %vm834 = vmor %vm832, %vm833
    %v835 = vsel %vm834, %v827, %v831
    %v836 = vand.u32 2147483647, %v825
    %vm837 = vcmp.eq.f32.partialorder %v836, 8.507059e+37
    %v838 = vand.u32 %v825, 2147483648
    %v839 = vor.u32 1.1754944e-38, %v838
    %v840 = vsel %vm837, %v839, %v835
    %v841 = vmul.f32 1.0, %v840
    %v842 = vrcp.pop %v826
    %v843 = vmul.f32 %v826, %v842
    %v844 = vsub.f32 1.0, %v843
    %v845 = vmul.f32 %v842, %v844
    %v846 = vadd.f32 %v842, %v845
    %vm847 = vweird.f32 %v826
    %vm848 = vweird.f32 %v842
    %vm849 = vmor %vm847, %vm848
    %v850 = vsel %vm849, %v842, %v846
    %v851 = vand.u32 2147483647, %v826
    %vm852 = vcmp.eq.f32.partialorder %v851, 8.507059e+37
    %v853 = vand.u32 %v826, 2147483648
    %v854 = vor.u32 1.1754944e-38, %v853
    %v855 = vsel %vm852, %v854, %v850
    %v856 = vmul.f32 1.0, %v855
    %v857 = vsub.f32 1.0, %v841
    %v858 = vsub.f32 1.0, %v856
    %v859 = vmul.f32 %v857, %v756
    %v860 = vmul.f32 %v858, %v757
    %v861 = vmul.f32 %v841, %v705
    %v862 = vmul.f32 %v856, %v706
    %v863 = vadd.f32 %v859, %v861
    %v864 = vadd.f32 %v860, %v862
    %v866 = vsel %vm387, %v654, 0
    %v869 = vsel %vm387, %v655, 0
    %871 = vmatpush.msra.mxu0 0.0
    %872 = vmatpush.msra.mxu0 0.0
    %873 = vmatpush.msra.mxu0 0.0
    %874 = vmatpush.msra.mxu0 0.0
    %875 = vmatpush.msra.mxu0 0.0
    %876 = vmatpush.msra.mxu0 0.0
    %877 = vmatpush.msra.mxu0 0.0
    %878 = vmatpush.msra.mxu0 0.0
    %879 = vmatpush.msra.mxu0 0.0
    %880 = vmatpush.msra.mxu0 0.0
    %881 = vmatpush.msra.mxu0 0.0
    %882 = vmatpush.msra.mxu0 0.0
    %883 = vmatpush.msra.mxu0 %v43
    %884 = vmatpush.msra.mxu0 %v42
    %885 = vmatpush.msra.mxu0 %v41
    %886 = vmatpush.msra.mxu0 %v40
    %887 = vmatmul.f32.gmra.mxu0 %v866
    %v888 = vpop.f32.mrf.mxu0
    %v889 = vadd.f32 0.0, %v888
    %890 = vmatmul.f32.gmra.mxu0 %v869
    %v891 = vpop.f32.mrf.mxu0
    %v892 = vadd.f32 0.0, %v891
    %893 = vdwg.mxu0
    %v895 = vsel %vm387, %v863, 0
    %v898 = vsel %vm387, %v864, 0
    %900 = vmatpush.msra.mxu0 0.0
    %901 = vmatpush.msra.mxu0 0.0
    %902 = vmatpush.msra.mxu0 0.0
    %903 = vmatpush.msra.mxu0 0.0
    %904 = vmatpush.msra.mxu0 0.0
    %905 = vmatpush.msra.mxu0 0.0
    %906 = vmatpush.msra.mxu0 0.0
    %907 = vmatpush.msra.mxu0 0.0
    %908 = vmatpush.msra.mxu0 0.0
    %909 = vmatpush.msra.mxu0 0.0
    %910 = vmatpush.msra.mxu0 0.0
    %911 = vmatpush.msra.mxu0 0.0
    %912 = vmatpush.msra.mxu0 %v47
    %913 = vmatpush.msra.mxu0 %v46
    %914 = vmatpush.msra.mxu0 %v45
    %915 = vmatpush.msra.mxu0 %v44
    %916 = vmatmul.f32.gmra.mxu0 %v895
    %v917 = vpop.f32.mrf.mxu0
    %v918 = vadd.f32 0.0, %v917
    %919 = vmatmul.f32.gmra.mxu0 %v898
    %v920 = vpop.f32.mrf.mxu0
    %v921 = vadd.f32 0.0, %v920
    %922 = vdwg.mxu0
    %v923 = vadd.f32 %v889, %v918
    %v924 = vadd.f32 %v892, %v921
    %v925 = vxor.u32 %v923, 2147483648
    %v926 = vxor.u32 %v924, 2147483648
    %v927 = vmul.f32 %v925, 1.442695
    %v928 = vpow.pop %v927
    %v929 = vmul.f32 %v926, 1.442695
    %v930 = vpow.pop %v929
    %v931 = vadd.f32 %v928, 1.0
    %v932 = vadd.f32 %v930, 1.0
    %v933 = vrcp.pop %v931
    %v934 = vmul.f32 %v931, %v933
    %v935 = vsub.f32 1.0, %v934
    %v936 = vmul.f32 %v933, %v935
    %v937 = vadd.f32 %v933, %v936
    %vm938 = vweird.f32 %v931
    %vm939 = vweird.f32 %v933
    %vm940 = vmor %vm938, %vm939
    %v941 = vsel %vm940, %v933, %v937
    %v942 = vand.u32 2147483647, %v931
    %vm943 = vcmp.eq.f32.partialorder %v942, 8.507059e+37
    %v944 = vand.u32 %v931, 2147483648
    %v945 = vor.u32 1.1754944e-38, %v944
    %v946 = vsel %vm943, %v945, %v941
    %v947 = vmul.f32 1.0, %v946
    %v948 = vrcp.pop %v932
    %v949 = vmul.f32 %v932, %v948
    %v950 = vsub.f32 1.0, %v949
    %v951 = vmul.f32 %v948, %v950
    %v952 = vadd.f32 %v948, %v951
    %vm953 = vweird.f32 %v932
    %vm954 = vweird.f32 %v948
    %vm955 = vmor %vm953, %vm954
    %v956 = vsel %vm955, %v948, %v952
    %v957 = vand.u32 2147483647, %v932
    %vm958 = vcmp.eq.f32.partialorder %v957, 8.507059e+37
    %v959 = vand.u32 %v932, 2147483648
    %v960 = vor.u32 1.1754944e-38, %v959
    %v961 = vsel %vm958, %v960, %v956
    %v962 = vmul.f32 1.0, %v961
    %963 = vrot.lane.b32.xlu0 %v654, 32
    %v964 = vpop.permute.xlu0 %963
    %965 = vrot.lane.b32.xlu0 %v655, 32
    %v966 = vpop.permute.xlu0 %965
    %v969 = vmul.f32 %v947, %v964
    %v970 = vmul.f32 %v962, %v966
    %973 = vrot.lane.b32.xlu0 %v969, 96
    %v974 = vpop.permute.xlu0 %973
    %975 = vrot.lane.b32.xlu0 %v970, 96
    %v976 = vpop.permute.xlu0 %975
    %979 = vrot.lane.b32.xlu0 %v918, 64
    %v980 = vpop.permute.xlu0 %979
    %981 = vrot.lane.b32.xlu0 %v921, 64
    %v982 = vpop.permute.xlu0 %981
    %v985 = vsel %vm387, %v974, 0
    %v987 = vsel %vm387, %v976, 0
    %989 = vmatpush.msra.mxu0 0.0
    %990 = vmatpush.msra.mxu0 0.0
    %991 = vmatpush.msra.mxu0 0.0
    %992 = vmatpush.msra.mxu0 0.0
    %993 = vmatpush.msra.mxu0 0.0
    %994 = vmatpush.msra.mxu0 0.0
    %995 = vmatpush.msra.mxu0 0.0
    %996 = vmatpush.msra.mxu0 0.0
    %997 = vmatpush.msra.mxu0 0.0
    %998 = vmatpush.msra.mxu0 0.0
    %999 = vmatpush.msra.mxu0 0.0
    %1000 = vmatpush.msra.mxu0 0.0
    %1001 = vmatpush.msra.mxu0 %v51
    %1002 = vmatpush.msra.mxu0 %v50
    %1003 = vmatpush.msra.mxu0 %v49
    %1004 = vmatpush.msra.mxu0 %v48
    %1005 = vmatmul.f32.gmra.mxu0 %v985
    %v1006 = vpop.f32.mrf.mxu0
    %v1007 = vadd.f32 %v980, %v1006
    %1008 = vmatmul.f32.gmra.mxu0 %v987
    %v1009 = vpop.f32.mrf.mxu0
    %v1010 = vadd.f32 %v982, %v1009
    %1011 = vdwg.mxu0
    %v1012 = vtanh.pop %v1007
    %v1013 = vtanh.pop %v1010
    %v1014 = vsub.f32 1.0, %v947
    %v1015 = vsub.f32 1.0, %v962
    %v1016 = vmul.f32 %v1014, %v654
    %v1017 = vmul.f32 %v1015, %v655
    %v1018 = vmul.f32 %v947, %v1012
    %v1019 = vmul.f32 %v962, %v1013
    %v1020 = vadd.f32 %v1016, %v1018
    %v1021 = vadd.f32 %v1017, %v1019
    %vm1022 = vcmask 253952
    %1023 = vst.msk [vmem:[#allocation5] sm:$0x1] %vm1022, %v1020
    %vm1024 = vcmask 254977
    %1025 = vst.msk [vmem:[#allocation5 + $0x1] sm:$0x2] %vm1024, %v1020
    %vm1026 = vcmask 256002
    %1027 = vst.msk [vmem:[#allocation5 + $0x2] sm:$0x4] %vm1026, %v1020
    %vm1028 = vcmask 257027
    %1029 = vst.msk [vmem:[#allocation5 + $0x3] sm:$0x8] %vm1028, %v1020
    %vm1030 = vcmask 258052
    %1031 = vst.msk [vmem:[#allocation5 + $0x4] sm:$0x10] %vm1030, %v1020
    %vm1032 = vcmask 259077
    %1033 = vst.msk [vmem:[#allocation5 + $0x5] sm:$0x20] %vm1032, %v1020
    %vm1034 = vcmask 260102
    %1035 = vst.msk [vmem:[#allocation5 + $0x6] sm:$0x40] %vm1034, %v1020
    %vm1036 = vcmask 261127
    %1037 = vst.msk [vmem:[#allocation5 + $0x7] sm:$0x80] %vm1036, %v1020
    %1038 = vst.msk [vmem:[#allocation5 + $0x1] sm:$0x1] %vm1022, %v1021
    %1039 = vst.msk [vmem:[#allocation5 + $0x2] sm:$0x2] %vm1024, %v1021
    %1040 = vst.msk [vmem:[#allocation5 + $0x3] sm:$0x4] %vm1026, %v1021
    %1041 = vst.msk [vmem:[#allocation5 + $0x4] sm:$0x8] %vm1028, %v1021
    %1042 = vst.msk [vmem:[#allocation5 + $0x5] sm:$0x10] %vm1030, %v1021
    %1043 = vst.msk [vmem:[#allocation5 + $0x6] sm:$0x20] %vm1032, %v1021
    %1044 = vst.msk [vmem:[#allocation5 + $0x7] sm:$0x40] %vm1034, %v1021
    %1045 = vst.msk [vmem:[#allocation5 + $0x8] sm:$0x80] %vm1036, %v1021
    %v1047 = vsel %vm387, %v1020, 0
    %v1050 = vsel %vm387, %v1021, 0
    %1052 = vmatpush.msra.mxu0 0.0
    %1053 = vmatpush.msra.mxu0 0.0
    %1054 = vmatpush.msra.mxu0 0.0
    %1055 = vmatpush.msra.mxu0 0.0
    %1056 = vmatpush.msra.mxu0 0.0
    %1057 = vmatpush.msra.mxu0 0.0
    %1058 = vmatpush.msra.mxu0 0.0
    %1059 = vmatpush.msra.mxu0 0.0
    %1060 = vmatpush.msra.mxu0 0.0
    %1061 = vmatpush.msra.mxu0 0.0
    %1062 = vmatpush.msra.mxu0 0.0
    %1063 = vmatpush.msra.mxu0 0.0
    %1064 = vmatpush.msra.mxu0 %v55
    %1065 = vmatpush.msra.mxu0 %v54
    %1066 = vmatpush.msra.mxu0 %v53
    %1067 = vmatpush.msra.mxu0 %v52
    %1068 = vmatmul.f32.gmra.mxu0 %v1047
    %v1069 = vpop.f32.mrf.mxu0
    %v1070 = vadd.f32 0.0, %v1069
    %1071 = vmatmul.f32.gmra.mxu0 %v1050
    %v1072 = vpop.f32.mrf.mxu0
    %v1073 = vadd.f32 0.0, %v1072
    %1074 = vdwg.mxu0
    %v1075 = vsel %vm387, %v1070, -inf
    %v1076 = vrot.slane %v1075, 4
    %v1077 = vmax.f32 %v1075, %v1076
    %v1078 = vrot.slane %v1077, 2
    %v1079 = vmax.f32 %v1077, %v1078
    %v1080 = vrot.slane %v1079, 1
    %v1081 = vmax.f32 %v1079, %v1080
    %1082 = vst.msk [vmem:[#allocation7] sm:$0x1] %vm1022, %v1081
    %v1083 = vsel %vm387, %v1073, -inf
    %v1084 = vrot.slane %v1083, 4
    %v1085 = vmax.f32 %v1083, %v1084
    %v1086 = vrot.slane %v1085, 2
    %v1087 = vmax.f32 %v1085, %v1086
    %v1088 = vrot.slane %v1087, 1
    %v1089 = vmax.f32 %v1087, %v1088
    %1090 = vst.msk [vmem:[#allocation7 + $0x1] sm:$0x1] %vm1022, %v1089
    // Predicated region
    $region18: #{graphnn_forward.1} parent=1 // pred_check
      _
    $region19: #{graphnn_forward.1} parent=1 // pred_check_branch
      %1092 = sbr.rel (0) target = $region21
    $region20: #{graphnn_forward.1} parent=1 // pred_region
      %1094 = vsyncadd [#allocation6], 0
      %s1095 = sshll.u32 [#allocation5], 4
      %s1096 = int_to_ptr.vmem [resolvable:$true] %s1095
      %s1097 = sshll.u32 %s4, 4
      %s1098 = int_to_ptr.hbm [resolvable:$true] %s1097
      %1103 = dma.vmem_to_hbm [thread:$0]  %s1096, 256, %s1098, [#allocation6], 128, 128, 8
    $region21: #{graphnn_forward.1} parent=1 // pred_fallthru
      _
    // Predicated region
    $region22: #{graphnn_forward.1} parent=1 // pred_check
      _
    $region23: #{graphnn_forward.1} parent=1 // pred_check_branch
      %1105 = sbr.rel (0) target = $region25
    $region24: #{graphnn_forward.1} parent=1 // pred_region
      %1107 = vsyncadd [#allocation8], 0
      %s1109 = sshll.u32 [#allocation7], 4
      %s1110 = int_to_ptr.vmem [resolvable:$true] %s1109
      %s1111 = sshll.u32 %s5, 4
      %s1112 = int_to_ptr.hbm [resolvable:$true] %s1111
      %1114 = dma.vmem_to_hbm [thread:$0]  %s1110, 32, %s1112, [#allocation8]
    $region25: #{graphnn_forward.1} parent=1 // pred_fallthru
      _
    // Predicated region
    $region26: #{graphnn_forward.1} parent=1 // pred_check
      _
    $region27: #{graphnn_forward.1} parent=1 // pred_check_branch
      %1116 = sbr.rel (0) target = $region29
    $region28: #{graphnn_forward.1} parent=1 // pred_region
      %1118 = dma.done [#allocation6], 256
    $region29: #{graphnn_forward.1} parent=1 // pred_fallthru
      _
    // Predicated region
    $region30: #{graphnn_forward.1} parent=1 // pred_check
      _
    $region31: #{graphnn_forward.1} parent=1 // pred_check_branch
      %1120 = sbr.rel (0) target = $region33
    $region32: #{graphnn_forward.1} parent=1 // pred_region
      %1122 = dma.done [#allocation8], 32
    $region33: #{graphnn_forward.1} parent=1 // pred_fallthru
      _
    %1123 = vsyncpa [#allocation6], 1
    %1124 = vsyncpa [#allocation8], 1

</llo_original>
